<compile_context>
chip_gen: v5e
topology: v5e:2x2
jax: 0.10.0
libtpu: 0.0.40
codegen_flags: <defaults>
</compile_context>

<pallas_src>
import functools

import jax
import jax.numpy as jnp
from jax import lax
from jax.experimental import pallas as pl
from jax.experimental.pallas import tpu as pltpu


# --------------------------------------------------------------------------
# Fused discriminator kernel (one row-tile of the batch per grid step).
# --------------------------------------------------------------------------
def _wdisc_kernel(x_ref, w1_ref, b1_ref, w2_ref, b2_ref, w3t_ref, b3_ref, o_ref,
                  *, bf16_epilogue):
    ew = jnp.bfloat16 if bf16_epilogue else jnp.float32

    # Layer 1: (tr, H) @ (H, H2) -> f32 MXU accumulation. x is cast to bf16
    # in-kernel (free VPU op; avoids a separate XLA cast + HBM round-trip).
    h = jnp.dot(x_ref[...].astype(jnp.bfloat16), w1_ref[...],
                preferred_element_type=jnp.float32)
    h = h.astype(ew) + b1_ref[...]
    h = jnp.where(h >= 0, h, 0.2 * h)                 # LeakyReLU(0.2)

    # Layer 2: (tr, H2) @ (H2, H2) -> f32 MXU accumulation.
    h = jnp.dot(h.astype(jnp.bfloat16), w2_ref[...],
                preferred_element_type=jnp.float32)
    h = h.astype(ew) + b2_ref[...]
    h = jnp.where(h >= 0, h, 0.2 * h)                 # LeakyReLU(0.2)

    # Layer 3: contract (1, H2) with (tr, H2) over H2 -> lane-dense (1, tr).
    out = lax.dot_general(w3t_ref[...], h.astype(jnp.bfloat16),
                          (((1,), (1,)), ((), ())),
                          preferred_element_type=jnp.float32)
    o_ref[...] = out + b3_ref[...]                    # (1,1) broadcasts


# --------------------------------------------------------------------------
# Wrapper
# --------------------------------------------------------------------------
def _vpu_has_bf16():
    """v6e / v7x VPUs are bf16-native; v5e and earlier are not."""
    try:
        kind = jax.devices()[0].device_kind.lower()
    except Exception:
        return False
    return any(tag in kind for tag in ("v6", "v7", "7x"))


def _pick_tile_rows(n, max_tile=256):
    """Prefer >=2 grid steps (2 TCs on v7x) and up to 256 rows per step
    (256-wide MXU fill on v6e/v7x). Row tile is a multiple of 8 sublanes."""
    if n <= 8:
        return n                                   # full-dim block is legal
    half = ((pl.cdiv(n, 2) + 7) // 8) * 8          # ~2 steps, sublane-aligned
    return min(max_tile, half)


def wasserstein_discriminator(x, params, *, tile_rows=None, bf16_epilogue=None):
    """Fused forward of the Wasserstein discriminator MLP.

    x:      (N, hidden_dim) float32
    params: ((w1, b1), (w2, b2), (w3, b3)) with PyTorch-Linear shapes
            w1 (H, H2), b1 (H2,), w2 (H2, H2), b2 (H2,), w3 (H2, 1), b3 (1,)
    returns (N, 1) float32
    """
    (w1, b1), (w2, b2), (w3, b3) = params
    n, h_in = x.shape
    h2 = w1.shape[1]

    tr = _pick_tile_rows(n) if tile_rows is None else min(tile_rows, n)
    grid = (pl.cdiv(n, tr),)          # ragged tail handled as a partial block

    if bf16_epilogue is None:
        bf16_epilogue = _vpu_has_bf16()
    ew = jnp.bfloat16 if bf16_epilogue else jnp.float32

    # bf16 matmul operands (f32 accumulation inside the kernel); biases in the
    # elementwise-epilogue dtype; final bias in f32 (output is f32).
    w1_bf = w1.astype(jnp.bfloat16)
    w2_bf = w2.astype(jnp.bfloat16)
    w3t_bf = w3.reshape(h2, 1).T.astype(jnp.bfloat16)      # (1, H2)
    b1_e = b1.reshape(1, h2).astype(ew)
    b2_e = b2.reshape(1, h2).astype(ew)
    b3_f = b3.reshape(1, 1).astype(jnp.float32)

    def resident(arr):
        # Grid-invariant block index -> fetched once, stays resident in VMEM.
        return pl.BlockSpec(arr.shape, lambda i: (0, 0))

    out = pl.pallas_call(
        functools.partial(_wdisc_kernel, bf16_epilogue=bf16_epilogue),
        out_shape=jax.ShapeDtypeStruct((1, n), jnp.float32),
        grid=grid,
        in_specs=[
            pl.BlockSpec((tr, h_in), lambda i: (i, 0)),     # f32 x row tile
            resident(w1_bf), resident(b1_e),
            resident(w2_bf), resident(b2_e),
            resident(w3t_bf), resident(b3_f),
        ],
        out_specs=pl.BlockSpec((1, tr), lambda i: (0, i)),  # lane-dense output
        compiler_params=pltpu.CompilerParams(
            dimension_semantics=("parallel",)),
    )(x, w1_bf, b1_e, w2_bf, b2_e, w3t_bf, b3_f)

    return out[0].reshape(n, 1)


# --------------------------------------------------------------------------
# Parameter init (matches nn.Linear default: U(-1/sqrt(fan_in), 1/sqrt(fan_in)))
# --------------------------------------------------------------------------
def init_discriminator(key, hidden_dim, hidden_dim2=512):
    def linear(k, fan_in, fan_out):
        kw, kb = jax.random.split(k)
        s = 1.0 / float(fan_in) ** 0.5
        w = jax.random.uniform(kw, (fan_in, fan_out), jnp.float32, -s, s)
        b = jax.random.uniform(kb, (fan_out,), jnp.float32, -s, s)
        return w, b

    k1, k2, k3 = jax.random.split(key, 3)
    return (linear(k1, hidden_dim, hidden_dim2),
            linear(k2, hidden_dim2, hidden_dim2),
            linear(k3, hidden_dim2, 1))


# --------------------------------------------------------------------------
# Pure-JAX float32 reference (mirrors the PyTorch forward).
# --------------------------------------------------------------------------
def reference_forward(x, params):
    (w1, b1), (w2, b2), (w3, b3) = params
    h = x @ w1 + b1
    h = jnp.where(h >= 0.0, h, 0.2 * h)
    h = h @ w2 + b2
    h = jnp.where(h >= 0.0, h, 0.2 * h)
    return h @ w3 + b3


if __name__ == "__main__":
    key = jax.random.PRNGKey(0)
    k_params, k_x = jax.random.split(key)

    hidden_dim = 128
    hidden_dim2 = 512
    batch = 256          # auto tile -> tr=128, grid=(2,) parallel row tiles

    params = init_discriminator(k_params, hidden_dim, hidden_dim2)
    x = jax.random.normal(k_x, (batch, hidden_dim), jnp.float32)

    fwd = jax.jit(functools.partial(wasserstein_discriminator, params=params))
    out = fwd(x)
    jax.block_until_ready(out)

    ref = reference_forward(x, params)

    assert out.shape == (batch, 1), out.shape
    assert bool(jnp.all(jnp.isfinite(out)))
    assert jnp.allclose(out, ref, rtol=2e-2, atol=2e-2), (
        float(jnp.max(jnp.abs(out - ref))))

    print("KERNEL_OK")
</pallas_src>

<mosaic_0001>
module attributes {stable_mosaic.version = 11 : i64} {
  func.func @_wdisc_kernel(%arg0: i32, %arg1: memref<128x128xf32, #tpu.memory_space<vmem>>, %arg2: memref<128x512xbf16, #tpu.memory_space<vmem>>, %arg3: memref<1x512xf32, #tpu.memory_space<vmem>>, %arg4: memref<512x512xbf16, #tpu.memory_space<vmem>>, %arg5: memref<1x512xf32, #tpu.memory_space<vmem>>, %arg6: memref<1x512xbf16, #tpu.memory_space<vmem>>, %arg7: memref<1x1xf32, #tpu.memory_space<vmem>>, %arg8: memref<1x128xf32, #tpu.memory_space<vmem>>) attributes {dimension_semantics = [#tpu.dimension_semantics<parallel>], iteration_bounds = array<i64: 2>, scalar_prefetch = 0 : i64, scratch_operands = 0 : i64, tpu.core_type = #tpu.core_type<tc>, window_params = [{transform_indices = @transform_0, window_bounds = array<i64: 128, 128>}, {pipeline_mode = #tpu.pipeline_mode<synchronous>, transform_indices = @transform_1, window_bounds = array<i64: 128, 512>}, {pipeline_mode = #tpu.pipeline_mode<synchronous>, transform_indices = @transform_2, window_bounds = array<i64: 1, 512>}, {pipeline_mode = #tpu.pipeline_mode<synchronous>, transform_indices = @transform_3, window_bounds = array<i64: 512, 512>}, {pipeline_mode = #tpu.pipeline_mode<synchronous>, transform_indices = @transform_4, window_bounds = array<i64: 1, 512>}, {pipeline_mode = #tpu.pipeline_mode<synchronous>, transform_indices = @transform_5, window_bounds = array<i64: 1, 512>}, {pipeline_mode = #tpu.pipeline_mode<synchronous>, transform_indices = @transform_6, window_bounds = array<i64: 1, 1>}, {transform_indices = @transform_7, window_bounds = array<i64: 1, 128>}]} {
    %c0 = arith.constant 0 : index
    %c0_0 = arith.constant 0 : index
    %0 = vector.load %arg1[%c0, %c0_0] : memref<128x128xf32, #tpu.memory_space<vmem>>, vector<128x128xf32>
    %1 = arith.truncf %0 : vector<128x128xf32> to vector<128x128xbf16>
    %c0_1 = arith.constant 0 : index
    %c0_2 = arith.constant 0 : index
    %2 = vector.load %arg2[%c0_1, %c0_2] : memref<128x512xbf16, #tpu.memory_space<vmem>>, vector<128x512xbf16>
    %cst = arith.constant dense<0.000000e+00> : vector<128x512xf32>
    %3 = tpu.matmul %1, %2, %cst {dimension_numbers = #tpu.dot_dimension_numbers<[1], [0], [0], [1], [0, 0, 1, 1], [], []>} : vector<128x128xbf16>, vector<128x512xbf16>, vector<128x512xf32> -> vector<128x512xf32>
    %c0_3 = arith.constant 0 : index
    %c0_4 = arith.constant 0 : index
    %4 = vector.load %arg3[%c0_3, %c0_4] : memref<1x512xf32, #tpu.memory_space<vmem>>, vector<1x512xf32>
    %5 = vector.broadcast %4 : vector<1x512xf32> to vector<128x512xf32>
    %6 = arith.addf %3, %5 : vector<128x512xf32>
    %cst_5 = arith.constant 0.000000e+00 : f32
    %7 = vector.broadcast %cst_5 : f32 to vector<128x512xf32>
    %8 = arith.cmpf oge, %6, %7 : vector<128x512xf32>
    %cst_6 = arith.constant 2.000000e-01 : f32
    %9 = vector.broadcast %cst_6 : f32 to vector<128x512xf32>
    %10 = arith.mulf %9, %6 : vector<128x512xf32>
    %11 = arith.select %8, %6, %10 : vector<128x512xi1>, vector<128x512xf32>
    %12 = arith.truncf %11 : vector<128x512xf32> to vector<128x512xbf16>
    %c0_7 = arith.constant 0 : index
    %c0_8 = arith.constant 0 : index
    %13 = vector.load %arg4[%c0_7, %c0_8] : memref<512x512xbf16, #tpu.memory_space<vmem>>, vector<512x512xbf16>
    %cst_9 = arith.constant dense<0.000000e+00> : vector<128x512xf32>
    %14 = tpu.matmul %12, %13, %cst_9 {dimension_numbers = #tpu.dot_dimension_numbers<[1], [0], [0], [1], [0, 0, 1, 1], [], []>} : vector<128x512xbf16>, vector<512x512xbf16>, vector<128x512xf32> -> vector<128x512xf32>
    %c0_10 = arith.constant 0 : index
    %c0_11 = arith.constant 0 : index
    %15 = vector.load %arg5[%c0_10, %c0_11] : memref<1x512xf32, #tpu.memory_space<vmem>>, vector<1x512xf32>
    %16 = vector.broadcast %15 : vector<1x512xf32> to vector<128x512xf32>
    %17 = arith.addf %14, %16 : vector<128x512xf32>
    %cst_12 = arith.constant 0.000000e+00 : f32
    %18 = vector.broadcast %cst_12 : f32 to vector<128x512xf32>
    %19 = arith.cmpf oge, %17, %18 : vector<128x512xf32>
    %cst_13 = arith.constant 2.000000e-01 : f32
    %20 = vector.broadcast %cst_13 : f32 to vector<128x512xf32>
    %21 = arith.mulf %20, %17 : vector<128x512xf32>
    %22 = arith.select %19, %17, %21 : vector<128x512xi1>, vector<128x512xf32>
    %c0_14 = arith.constant 0 : index
    %c0_15 = arith.constant 0 : index
    %23 = vector.load %arg6[%c0_14, %c0_15] : memref<1x512xbf16, #tpu.memory_space<vmem>>, vector<1x512xbf16>
    %24 = arith.truncf %22 : vector<128x512xf32> to vector<128x512xbf16>
    %cst_16 = arith.constant dense<0.000000e+00> : vector<1x128xf32>
    %25 = tpu.matmul %23, %24, %cst_16 {dimension_numbers = #tpu.dot_dimension_numbers<[1], [1], [0], [0], [0, 0, 1, 0], [], []>} : vector<1x512xbf16>, vector<128x512xbf16>, vector<1x128xf32> -> vector<1x128xf32>
    %c0_17 = arith.constant 0 : index
    %c0_18 = arith.constant 0 : index
    %26 = vector.load %arg7[%c0_17, %c0_18] : memref<1x1xf32, #tpu.memory_space<vmem>>, vector<1x1xf32>
    %27 = vector.broadcast %26 : vector<1x1xf32> to vector<1x128xf32>
    %28 = arith.addf %25, %27 : vector<1x128xf32>
    %c0_19 = arith.constant 0 : index
    %c0_20 = arith.constant 0 : index
    %29 = vector.load %arg8[%c0_19, %c0_20] : memref<1x128xf32, #tpu.memory_space<vmem>>, vector<1x128xf32>
    tpu.vector_store %arg8[%c0_19, %c0_20], %28 {strides = array<i32>} : memref<1x128xf32, #tpu.memory_space<vmem>>, vector<1x128xf32>,
    return
  }
  func.func @transform_0(%arg0: i32) -> (i32, i32) {
    %c0_i32 = arith.constant 0 : i32
    %c0_i32_0 = arith.constant 0 : i32
    return %arg0, %c0_i32 : i32, i32
  }
  func.func @transform_1(%arg0: i32) -> (i32, i32) {
    %c0_i32 = arith.constant 0 : i32
    %c0_i32_0 = arith.constant 0 : i32
    %c0_i32_1 = arith.constant 0 : i32
    return %c0_i32, %c0_i32_0 : i32, i32
  }
  func.func @transform_2(%arg0: i32) -> (i32, i32) {
    %c0_i32 = arith.constant 0 : i32
    %c0_i32_0 = arith.constant 0 : i32
    %c0_i32_1 = arith.constant 0 : i32
    return %c0_i32, %c0_i32_0 : i32, i32
  }
  func.func @transform_3(%arg0: i32) -> (i32, i32) {
    %c0_i32 = arith.constant 0 : i32
    %c0_i32_0 = arith.constant 0 : i32
    %c0_i32_1 = arith.constant 0 : i32
    return %c0_i32, %c0_i32_0 : i32, i32
  }
  func.func @transform_4(%arg0: i32) -> (i32, i32) {
    %c0_i32 = arith.constant 0 : i32
    %c0_i32_0 = arith.constant 0 : i32
    %c0_i32_1 = arith.constant 0 : i32
    return %c0_i32, %c0_i32_0 : i32, i32
  }
  func.func @transform_5(%arg0: i32) -> (i32, i32) {
    %c0_i32 = arith.constant 0 : i32
    %c0_i32_0 = arith.constant 0 : i32
    %c0_i32_1 = arith.constant 0 : i32
    return %c0_i32, %c0_i32_0 : i32, i32
  }
  func.func @transform_6(%arg0: i32) -> (i32, i32) {
    %c0_i32 = arith.constant 0 : i32
    %c0_i32_0 = arith.constant 0 : i32
    %c0_i32_1 = arith.constant 0 : i32
    return %c0_i32, %c0_i32_0 : i32, i32
  }
  func.func @transform_7(%arg0: i32) -> (i32, i32) {
    %c0_i32 = arith.constant 0 : i32
    %c0_i32_0 = arith.constant 0 : i32
    return %c0_i32, %arg0 : i32, i32
  }
}

</mosaic_0001>

<llo_original>
// kernel: wasserstein_discriminator.1
$region0: #{wasserstein_discriminator.1}
  #allocation0 [shape = 'u32[]', space=smem, size = 0x4, offset = 0x4, fixed_abs, tag = 'smem constant byte address 0x4 - core index']
  #allocation1 [shape = 'u32[72,128]{1,0:T(1,128)}', space=vmem, size = 0x9000, scoped, tag = 'internal scratch']
  #allocation2 [shape = 'f32[1,1]{1,0:T(1,128)S(1)}', space=vmem, size = 0x200, scoped, tag = 'scoped memory for wasserstein_discriminator.1']
  %s0 = inlined_call_operand.hbm [shape: f32[256,128], index: 0, kind: input, shape index: {}]
  %s1 = inlined_call_operand.hbm [shape: bf16[128,512], index: 1, kind: input, shape index: {}]
  %s2 = inlined_call_operand.hbm [shape: f32[1,512], index: 2, kind: input, shape index: {}]
  %s3 = inlined_call_operand.hbm [shape: bf16[512,512], index: 3, kind: input, shape index: {}]
  %s4 = inlined_call_operand.hbm [shape: f32[1,512], index: 4, kind: input, shape index: {}]
  %s5 = inlined_call_operand.hbm [shape: bf16[1,512], index: 5, kind: input, shape index: {}]
  %s6 = inlined_call_operand.<no memory space> [shape: f32[1,1], index: 6, kind: input, shape index: {}]
  %s7 = inlined_call_operand.hbm [shape: f32[1,256], index: 7, kind: output, shape index: {}]
  %s8 = sld [smem:[#allocation0]]
  $region85: #{wasserstein_discriminator.1} parent=0
    _
  %s10 = ssub.s32 1, %s8
  %s11 = scalar_select 0, %s10, %s8
  %v12 = vstv %s6
  %13 = vst [vmem:[#allocation2] sm:$0x1] %v12
  $region1: #{wasserstein_discriminator.1} parent=0
    #allocation3 [shape = 'u8[131072]{0}', space=vmem, size = 0x20000, scoped, tag = 'input window, operand 0']
    #allocation4 [shape = 's32[2]{0}', space=sflag, size = 0x8, scoped, tag = 'scoped memory for wasserstein_discriminator.1']
    #allocation5 [shape = 's32[2]{0}', space=sflag, size = 0x8, scoped, tag = 'scoped memory for wasserstein_discriminator.1']
    #allocation6 [shape = 'u8[131072]{0}', space=vmem, size = 0x20000, scoped, tag = 'input window, operand 1, single buffered']
    #allocation7 [shape = 's32[1]{0}', space=sflag, size = 0x4, scoped, tag = 'scoped memory for wasserstein_discriminator.1']
    #allocation8 [shape = 'u8[2048]{0}', space=vmem, size = 0x800, scoped, tag = 'input window, operand 2, single buffered']
    #allocation9 [shape = 'u8[524288]{0}', space=vmem, size = 0x80000, scoped, tag = 'input window, operand 3, single buffered']
    #allocation10 [shape = 's32[1]{0}', space=sflag, size = 0x4, scoped, tag = 'scoped memory for wasserstein_discriminator.1']
    #allocation11 [shape = 'u8[2048]{0}', space=vmem, size = 0x800, scoped, tag = 'input window, operand 4, single buffered']
    #allocation12 [shape = 'u8[2048]{0}', space=vmem, size = 0x800, scoped, tag = 'input window, operand 5, single buffered']
    #allocation13 [shape = 's32[1]{0}', space=sflag, size = 0x4, scoped, tag = 'scoped memory for wasserstein_discriminator.1']
    #allocation14 [shape = 'u8[1024]{0}', space=vmem, size = 0x400, scoped, tag = 'output window, operand 0']
    %14 = vsyncpa [#allocation4], 0
    %s15 = scalar_lea.sflag [#allocation4], 1
    %16 = vsyncpa %s15, 0
    %17 = vsyncpa [#allocation7], 0
    %18 = vsyncpa [#allocation10], 0
    %19 = vsyncpa [#allocation13], 0
    %20 = vsyncpa [#allocation5], 0
    %s21 = scalar_lea.sflag [#allocation5], 1
    %22 = vsyncpa %s21, 0
    loop: start=0, step=1, limit=4
    $region2: #{wasserstein_discriminator.1} parent=1 // loop_pre_header
      _
    $region3: #{wasserstein_discriminator.1} parent=1 // loop_header
      %s24 = sphi 0, %s28
      %p25 = scmp.ge.s32.totalorder %s24, 4
      %s34 = sphi 0, %s36
      %s37 = sphi 0, %s34
      %s38 = sphi 0, %s37
      %s54 = sphi 0, %s38
      %s58 = sphi 0, %s58
      %s60 = sphi 0, %s58
      %s61 = sphi 0, %s60
      %s75 = sphi 0, %s61
      %s79 = sphi 0, %s79
      %s81 = sphi 0, %s79
      %s82 = sphi 0, %s81
      %s96 = sphi 0, %s82
      %s100 = sphi 0, %s100
      %s102 = sphi 0, %s100
      %s103 = sphi 0, %s102
      %s117 = sphi 0, %s103
      %s121 = sphi 0, %s121
      %s123 = sphi 0, %s121
      %s124 = sphi 0, %s123
      %s138 = sphi 0, %s124
      %s142 = sphi 0, %s142
      %s144 = sphi 0, %s142
      %s145 = sphi 0, %s144
      %s159 = sphi 0, %s145
      %s163 = sphi 0, %s163
      %s165 = sphi 0, %s163
      %s166 = sphi 0, %s165
      %s180 = sphi 0, %s166
      %s186 = sphi 0, %s188
      %s189 = sphi 0, %s186
      %s190 = sphi 0, %s189
      %s206 = sphi 0, %s190
    $region4: #{wasserstein_discriminator.1} parent=1 // loop_header_branch
      %27 = sbr.rel (%p25) target = $region8
    $region5: #{wasserstein_discriminator.1} parent=1 // loop_body
      %s29 = ssub.s32 %s24, 1
      %s30 = ssub.s32 %s24, 2
      %s31 = sadd.s32 %s24, 1
      %s32 = ssub.s32 %s24, %s31
      %p33 = scmp.eq.s32.totalorder %s32, 0
      %s35 = sadd.s32 %s34, 1
      %s36 = scalar_select %p33, %s34, %s35
      %p39 = pneg %p33
      %p40 = scmp.eq.s32.totalorder %s24, 1
      %p41 = por %p39, %p40
      %p42 = scmp.ne.s32.totalorder %s34, %s37
      %p43 = scmp.eq.s32.totalorder %s24, 0
      %p44 = por %p42, %p43
      %p45 = scmp.ne.s32.totalorder %s34, %s37
      %p46 = scmp.eq.s32.totalorder %s29, 1
      %p47 = por %p45, %p46
      %p48 = scmp.ne.s32.totalorder %s37, %s38
      %p49 = scmp.eq.s32.totalorder %s29, 0
      %p50 = por %p48, %p49
      %p51 = scmp.ne.s32.totalorder %s37, %s38
      %p52 = scmp.eq.s32.totalorder %s30, 1
      %p53 = por %p51, %p52
      %p55 = scmp.ne.s32.totalorder %s38, %s54
      %p56 = scmp.eq.s32.totalorder %s30, 0
      %p57 = por %p55, %p56
      %s59 = sadd.s32 %s58, 1
      %p62 = scmp.eq.s32.totalorder %s24, 1
      %p63 = scmp.ne.s32.totalorder %s58, %s60
      %p64 = scmp.eq.s32.totalorder %s24, 0
      %p65 = por %p63, %p64
      %p66 = scmp.ne.s32.totalorder %s58, %s60
      %p67 = scmp.eq.s32.totalorder %s29, 1
      %p68 = por %p66, %p67
      %p69 = scmp.ne.s32.totalorder %s60, %s61
      %p70 = scmp.eq.s32.totalorder %s29, 0
      %p71 = por %p69, %p70
      %p72 = scmp.ne.s32.totalorder %s60, %s61
      %p73 = scmp.eq.s32.totalorder %s30, 1
      %p74 = por %p72, %p73
      %p76 = scmp.ne.s32.totalorder %s61, %s75
      %p77 = scmp.eq.s32.totalorder %s30, 0
      %p78 = por %p76, %p77
      %s80 = sadd.s32 %s79, 1
      %p83 = scmp.eq.s32.totalorder %s24, 1
      %p84 = scmp.ne.s32.totalorder %s79, %s81
      %p85 = scmp.eq.s32.totalorder %s24, 0
      %p86 = por %p84, %p85
      %p87 = scmp.ne.s32.totalorder %s79, %s81
      %p88 = scmp.eq.s32.totalorder %s29, 1
      %p89 = por %p87, %p88
      %p90 = scmp.ne.s32.totalorder %s81, %s82
      %p91 = scmp.eq.s32.totalorder %s29, 0
      %p92 = por %p90, %p91
      %p93 = scmp.ne.s32.totalorder %s81, %s82
      %p94 = scmp.eq.s32.totalorder %s30, 1
      %p95 = por %p93, %p94
      %p97 = scmp.ne.s32.totalorder %s82, %s96
      %p98 = scmp.eq.s32.totalorder %s30, 0
      %p99 = por %p97, %p98
      %s101 = sadd.s32 %s100, 1
      %p104 = scmp.eq.s32.totalorder %s24, 1
      %p105 = scmp.ne.s32.totalorder %s100, %s102
      %p106 = scmp.eq.s32.totalorder %s24, 0
      %p107 = por %p105, %p106
      %p108 = scmp.ne.s32.totalorder %s100, %s102
      %p109 = scmp.eq.s32.totalorder %s29, 1
      %p110 = por %p108, %p109
      %p111 = scmp.ne.s32.totalorder %s102, %s103
      %p112 = scmp.eq.s32.totalorder %s29, 0
      %p113 = por %p111, %p112
      %p114 = scmp.ne.s32.totalorder %s102, %s103
      %p115 = scmp.eq.s32.totalorder %s30, 1
      %p116 = por %p114, %p115
      %p118 = scmp.ne.s32.totalorder %s103, %s117
      %p119 = scmp.eq.s32.totalorder %s30, 0
      %p120 = por %p118, %p119
      %s122 = sadd.s32 %s121, 1
      %p125 = scmp.eq.s32.totalorder %s24, 1
      %p126 = scmp.ne.s32.totalorder %s121, %s123
      %p127 = scmp.eq.s32.totalorder %s24, 0
      %p128 = por %p126, %p127
      %p129 = scmp.ne.s32.totalorder %s121, %s123
      %p130 = scmp.eq.s32.totalorder %s29, 1
      %p131 = por %p129, %p130
      %p132 = scmp.ne.s32.totalorder %s123, %s124
      %p133 = scmp.eq.s32.totalorder %s29, 0
      %p134 = por %p132, %p133
      %p135 = scmp.ne.s32.totalorder %s123, %s124
      %p136 = scmp.eq.s32.totalorder %s30, 1
      %p137 = por %p135, %p136
      %p139 = scmp.ne.s32.totalorder %s124, %s138
      %p140 = scmp.eq.s32.totalorder %s30, 0
      %p141 = por %p139, %p140
      %s143 = sadd.s32 %s142, 1
      %p146 = scmp.eq.s32.totalorder %s24, 1
      %p147 = scmp.ne.s32.totalorder %s142, %s144
      %p148 = scmp.eq.s32.totalorder %s24, 0
      %p149 = por %p147, %p148
      %p150 = scmp.ne.s32.totalorder %s142, %s144
      %p151 = scmp.eq.s32.totalorder %s29, 1
      %p152 = por %p150, %p151
      %p153 = scmp.ne.s32.totalorder %s144, %s145
      %p154 = scmp.eq.s32.totalorder %s29, 0
      %p155 = por %p153, %p154
      %p156 = scmp.ne.s32.totalorder %s144, %s145
      %p157 = scmp.eq.s32.totalorder %s30, 1
      %p158 = por %p156, %p157
      %p160 = scmp.ne.s32.totalorder %s145, %s159
      %p161 = scmp.eq.s32.totalorder %s30, 0
      %p162 = por %p160, %p161
      %s164 = sadd.s32 %s163, 1
      %p167 = scmp.eq.s32.totalorder %s24, 1
      %p168 = scmp.ne.s32.totalorder %s163, %s165
      %p169 = scmp.eq.s32.totalorder %s24, 0
      %p170 = por %p168, %p169
      %p171 = scmp.ne.s32.totalorder %s163, %s165
      %p172 = scmp.eq.s32.totalorder %s29, 1
      %p173 = por %p171, %p172
      %p174 = scmp.ne.s32.totalorder %s165, %s166
      %p175 = scmp.eq.s32.totalorder %s29, 0
      %p176 = por %p174, %p175
      %p177 = scmp.ne.s32.totalorder %s165, %s166
      %p178 = scmp.eq.s32.totalorder %s30, 1
      %p179 = por %p177, %p178
      %p181 = scmp.ne.s32.totalorder %s166, %s180
      %p182 = scmp.eq.s32.totalorder %s30, 0
      %p183 = por %p181, %p182
      %s184 = ssub.s32 %s24, %s31
      %p185 = scmp.eq.s32.totalorder %s184, 0
      %s187 = sadd.s32 %s186, 1
      %s188 = scalar_select %p185, %s186, %s187
      %p191 = pneg %p185
      %p192 = scmp.eq.s32.totalorder %s24, 1
      %p193 = por %p191, %p192
      %p194 = scmp.ne.s32.totalorder %s186, %s189
      %p195 = scmp.eq.s32.totalorder %s24, 0
      %p196 = por %p194, %p195
      %p197 = scmp.ne.s32.totalorder %s186, %s189
      %p198 = scmp.eq.s32.totalorder %s29, 1
      %p199 = por %p197, %p198
      %p200 = scmp.ne.s32.totalorder %s189, %s190
      %p201 = scmp.eq.s32.totalorder %s29, 0
      %p202 = por %p200, %p201
      %p203 = scmp.ne.s32.totalorder %s189, %s190
      %p204 = scmp.eq.s32.totalorder %s30, 1
      %p205 = por %p203, %p204
      %p207 = scmp.ne.s32.totalorder %s190, %s206
      %p208 = scmp.eq.s32.totalorder %s30, 0
      %p209 = por %p207, %p208
      %p210 = scmp.le.s32.totalorder 1, %s24
      %p211 = scmp.lt.s32.totalorder %s24, 3
      %p212 = pnand %p210, %p211
      %p213 = pneg %p212
      // Predicated region
      $region9: #{wasserstein_discriminator.1} parent=5 // pred_check
        _
      $region10: #{wasserstein_discriminator.1} parent=5 // pred_check_branch
        %215 = sbr.rel (%p212) target = $region12
      $region11: #{wasserstein_discriminator.1} parent=5 // pred_region
        %s216 = ssub.s32 %s24, 1
        // Predicated region
        $region13: #{wasserstein_discriminator.1} parent=11 // pred_check
          %p217 = pneg %p71
        $region14: #{wasserstein_discriminator.1} parent=11 // pred_check_branch
          %219 = sbr.rel (%p217) target = $region16
        $region15: #{wasserstein_discriminator.1} parent=11 // pred_region
          %221 = vsyncadd [#allocation7], 0
          %s222 = sshll.u32 %s1, 4
          %s223 = int_to_ptr.hbm [resolvable:$true] %s222
          %s224 = sshll.u32 [#allocation6], 4
          %s225 = int_to_ptr.vmem [resolvable:$true] %s224
          %230 = dma.hbm_to_vmem [thread:$0]  %s223, 4096, %s225, [#allocation7], 256, 256, 16
        $region16: #{wasserstein_discriminator.1} parent=11 // pred_fallthru
          _
        // Predicated region
        $region17: #{wasserstein_discriminator.1} parent=11 // pred_check
          %p231 = pneg %p92
        $region18: #{wasserstein_discriminator.1} parent=11 // pred_check_branch
          %233 = sbr.rel (%p231) target = $region20
        $region19: #{wasserstein_discriminator.1} parent=11 // pred_region
          %235 = vsyncadd [#allocation7], 0
          %s237 = sshll.u32 %s2, 4
          %s238 = int_to_ptr.hbm [resolvable:$true] %s237
          %s239 = sshll.u32 [#allocation8], 4
          %s240 = int_to_ptr.vmem [resolvable:$true] %s239
          %242 = dma.hbm_to_vmem [thread:$0]  %s238, 64, %s240, [#allocation7]
        $region20: #{wasserstein_discriminator.1} parent=11 // pred_fallthru
          _
        // Predicated region
        $region21: #{wasserstein_discriminator.1} parent=11 // pred_check
          %p243 = pneg %p113
        $region22: #{wasserstein_discriminator.1} parent=11 // pred_check_branch
          %245 = sbr.rel (%p243) target = $region24
        $region23: #{wasserstein_discriminator.1} parent=11 // pred_region
          %247 = vsyncadd [#allocation10], 0
          %s248 = sshll.u32 %s3, 4
          %s249 = int_to_ptr.hbm [resolvable:$true] %s248
          %s250 = sshll.u32 [#allocation9], 4
          %s251 = int_to_ptr.vmem [resolvable:$true] %s250
          %256 = dma.hbm_to_vmem [thread:$0]  %s249, 16384, %s251, [#allocation10], 256, 256, 16
        $region24: #{wasserstein_discriminator.1} parent=11 // pred_fallthru
          _
        // Predicated region
        $region25: #{wasserstein_discriminator.1} parent=11 // pred_check
          %p257 = pneg %p134
        $region26: #{wasserstein_discriminator.1} parent=11 // pred_check_branch
          %259 = sbr.rel (%p257) target = $region28
        $region27: #{wasserstein_discriminator.1} parent=11 // pred_region
          %261 = vsyncadd [#allocation10], 0
          %s263 = sshll.u32 %s4, 4
          %s264 = int_to_ptr.hbm [resolvable:$true] %s263
          %s265 = sshll.u32 [#allocation11], 4
          %s266 = int_to_ptr.vmem [resolvable:$true] %s265
          %268 = dma.hbm_to_vmem [thread:$0]  %s264, 64, %s266, [#allocation10]
        $region28: #{wasserstein_discriminator.1} parent=11 // pred_fallthru
          _
        // Predicated region
        $region29: #{wasserstein_discriminator.1} parent=11 // pred_check
          %p269 = pneg %p155
        $region30: #{wasserstein_discriminator.1} parent=11 // pred_check_branch
          %271 = sbr.rel (%p269) target = $region32
        $region31: #{wasserstein_discriminator.1} parent=11 // pred_region
          %273 = vsyncadd [#allocation13], 0
          %s275 = sshll.u32 %s5, 4
          %s276 = int_to_ptr.hbm [resolvable:$true] %s275
          %s277 = sshll.u32 [#allocation12], 4
          %s278 = int_to_ptr.vmem [resolvable:$true] %s277
          %280 = dma.hbm_to_vmem [thread:$0]  %s276, 64, %s278, [#allocation13]
        $region32: #{wasserstein_discriminator.1} parent=11 // pred_fallthru
          _
        // Predicated region
        $region33: #{wasserstein_discriminator.1} parent=11 // pred_check
          %p281 = pneg %p176
        $region34: #{wasserstein_discriminator.1} parent=11 // pred_check_branch
          %283 = sbr.rel (%p281) target = $region36
        $region35: #{wasserstein_discriminator.1} parent=11 // pred_region
          _
        $region36: #{wasserstein_discriminator.1} parent=11 // pred_fallthru
          _
      $region12: #{wasserstein_discriminator.1} parent=5 // pred_fallthru
        _
      %p284 = scmp.lt.s32.totalorder %s24, 2
      // Predicated region
      $region37: #{wasserstein_discriminator.1} parent=5 // pred_check
        %p285 = pneg %p284
      $region38: #{wasserstein_discriminator.1} parent=5 // pred_check_branch
        %287 = sbr.rel (%p285) target = $region40
      $region39: #{wasserstein_discriminator.1} parent=5 // pred_region
        // Predicated region
        $region41: #{wasserstein_discriminator.1} parent=39 // pred_check
          %p288 = pneg %p44
        $region42: #{wasserstein_discriminator.1} parent=39 // pred_check_branch
          %290 = sbr.rel (%p288) target = $region44
        $region43: #{wasserstein_discriminator.1} parent=39 // pred_region
          %s291 = sand.u32 %s34, 1
          %s292 = scalar_lea.sflag [#allocation4], %s291
          %s293 = sand.u32 %s34, 1
          %s294 = smul.addr %s293, 128
          %s295 = scalar_lea.vmem [#allocation3], %s294
          %s296 = smul.u32 16, %s24
          %298 = vsyncadd %s292, 0
          %s299 = smul.addr %s296, 8
          %s300 = scalar_lea.hbm %s0, %s299
          %s301 = sshll.u32 %s300, 4
          %s302 = int_to_ptr.hbm [resolvable:$true] %s301
          %s303 = sshll.u32 %s295, 4
          %s304 = int_to_ptr.vmem [resolvable:$true] %s303
          %309 = dma.hbm_to_vmem [thread:$0]  %s302, 2048, %s304, %s292, 128, 128, 8
        $region44: #{wasserstein_discriminator.1} parent=39 // pred_fallthru
          _
      $region40: #{wasserstein_discriminator.1} parent=5 // pred_fallthru
        _
      %p310 = scmp.le.s32.totalorder 1, %s24
      %p311 = scmp.lt.s32.totalorder %s24, 3
      %p312 = pnand %p310, %p311
      %p313 = pneg %p312
      // Predicated region
      $region45: #{wasserstein_discriminator.1} parent=5 // pred_check
        _
      $region46: #{wasserstein_discriminator.1} parent=5 // pred_check_branch
        %315 = sbr.rel (%p312) target = $region48
      $region47: #{wasserstein_discriminator.1} parent=5 // pred_region
        %s316 = ssub.s32 %s24, 1
        %s317 = sand.u32 %s37, 1
        %s318 = scalar_lea.sflag [#allocation4], %s317
        %s319 = sand.u32 %s37, 1
        %s320 = smul.addr %s319, 128
        %s321 = scalar_lea.vmem [#allocation3], %s320
        // Predicated region
        $region49: #{wasserstein_discriminator.1} parent=47 // pred_check
          %p322 = pneg %p50
        $region50: #{wasserstein_discriminator.1} parent=47 // pred_check_branch
          %324 = sbr.rel (%p322) target = $region52
        $region51: #{wasserstein_discriminator.1} parent=47 // pred_region
          %326 = dma.done %s318, 2048
        $region52: #{wasserstein_discriminator.1} parent=47 // pred_fallthru
          _
        // Predicated region
        $region53: #{wasserstein_discriminator.1} parent=47 // pred_check
          %p327 = pneg %p71
        $region54: #{wasserstein_discriminator.1} parent=47 // pred_check_branch
          %329 = sbr.rel (%p327) target = $region56
        $region55: #{wasserstein_discriminator.1} parent=47 // pred_region
          %331 = dma.done [#allocation7], 4096
        $region56: #{wasserstein_discriminator.1} parent=47 // pred_fallthru
          _
        // Predicated region
        $region57: #{wasserstein_discriminator.1} parent=47 // pred_check
          %p332 = pneg %p92
        $region58: #{wasserstein_discriminator.1} parent=47 // pred_check_branch
          %334 = sbr.rel (%p332) target = $region60
        $region59: #{wasserstein_discriminator.1} parent=47 // pred_region
          %336 = dma.done [#allocation7], 64
        $region60: #{wasserstein_discriminator.1} parent=47 // pred_fallthru
          _
        // Predicated region
        $region61: #{wasserstein_discriminator.1} parent=47 // pred_check
          %p337 = pneg %p113
        $region62: #{wasserstein_discriminator.1} parent=47 // pred_check_branch
          %339 = sbr.rel (%p337) target = $region64
        $region63: #{wasserstein_discriminator.1} parent=47 // pred_region
          %341 = dma.done [#allocation10], 16384
        $region64: #{wasserstein_discriminator.1} parent=47 // pred_fallthru
          _
        // Predicated region
        $region65: #{wasserstein_discriminator.1} parent=47 // pred_check
          %p342 = pneg %p134
        $region66: #{wasserstein_discriminator.1} parent=47 // pred_check_branch
          %344 = sbr.rel (%p342) target = $region68
        $region67: #{wasserstein_discriminator.1} parent=47 // pred_region
          %346 = dma.done [#allocation10], 64
        $region68: #{wasserstein_discriminator.1} parent=47 // pred_fallthru
          _
        // Predicated region
        $region69: #{wasserstein_discriminator.1} parent=47 // pred_check
          %p347 = pneg %p155
        $region70: #{wasserstein_discriminator.1} parent=47 // pred_check_branch
          %349 = sbr.rel (%p347) target = $region72
        $region71: #{wasserstein_discriminator.1} parent=47 // pred_region
          %351 = dma.done [#allocation13], 64
        $region72: #{wasserstein_discriminator.1} parent=47 // pred_fallthru
          _
        %s352 = sand.u32 %s37, 1
        %s353 = scalar_lea.sflag [#allocation4], %s352
        %s354 = sand.u32 %s37, 1
        %s355 = smul.addr %s354, 128
        %s356 = scalar_lea.vmem [#allocation3], %s355
        %p357 = pneg %p50
        %p358 = pneg %p47
        %p359 = pneg %p71
        %p360 = pneg %p68
        %p361 = pneg %p92
        %p362 = pneg %p89
        %p363 = pneg %p113
        %p364 = pneg %p110
        %p365 = pneg %p134
        %p366 = pneg %p131
        %p367 = pneg %p155
        %p368 = pneg %p152
        %p369 = pneg %p176
        %p370 = pneg %p173
        %p371 = pneg %p202
        %p372 = pneg %p199
        %s373 = sand.u32 %s189, 1
        %s374 = scalar_lea.sflag [#allocation5], %s373
        %s375 = sand.u32 %s189, 1
        %s376 = scalar_lea.vmem [#allocation14], %s375
        %s377 = smul.u32 16, %s29
        %v378 = vld [vmem:[%s321] sm:$0xff]
        %v379 = vld [vmem:[%s321 + $0x8] sm:$0xff]
        %v380 = vld [vmem:[%s321 + $0x10] sm:$0xff]
        %v381 = vld [vmem:[%s321 + $0x18] sm:$0xff]
        %v382 = vld [vmem:[%s321 + $0x20] sm:$0xff]
        %v383 = vld [vmem:[%s321 + $0x28] sm:$0xff]
        %v384 = vld [vmem:[%s321 + $0x30] sm:$0xff]
        %v385 = vld [vmem:[%s321 + $0x38] sm:$0xff]
        %v386 = vld [vmem:[%s321 + $0x40] sm:$0xff]
        %v387 = vld [vmem:[%s321 + $0x48] sm:$0xff]
        %v388 = vld [vmem:[%s321 + $0x50] sm:$0xff]
        %v389 = vld [vmem:[%s321 + $0x58] sm:$0xff]
        %v390 = vld [vmem:[%s321 + $0x60] sm:$0xff]
        %v391 = vld [vmem:[%s321 + $0x68] sm:$0xff]
        %v392 = vld [vmem:[%s321 + $0x70] sm:$0xff]
        %v393 = vld [vmem:[%s321 + $0x78] sm:$0xff]
        %v394 = vpack.c.bf16 %v379, %v378
        %v395 = vpack.c.bf16 %v381, %v380
        %v396 = vpack.c.bf16 %v383, %v382
        %v397 = vpack.c.bf16 %v385, %v384
        %v398 = vpack.c.bf16 %v387, %v386
        %v399 = vpack.c.bf16 %v389, %v388
        %v400 = vpack.c.bf16 %v391, %v390
        %v401 = vpack.c.bf16 %v393, %v392
        %v402 = vld [vmem:[#allocation6] sm:$0xff]
        %v403 = vld [vmem:[#allocation6 + $0x8] sm:$0xff]
        %v404 = vld [vmem:[#allocation6 + $0x10] sm:$0xff]
        %v405 = vld [vmem:[#allocation6 + $0x18] sm:$0xff]
        %v406 = vld [vmem:[#allocation6 + $0x20] sm:$0xff]
        %v407 = vld [vmem:[#allocation6 + $0x28] sm:$0xff]
        %v408 = vld [vmem:[#allocation6 + $0x30] sm:$0xff]
        %v409 = vld [vmem:[#allocation6 + $0x38] sm:$0xff]
        %v410 = vld [vmem:[#allocation6 + $0x40] sm:$0xff]
        %v411 = vld [vmem:[#allocation6 + $0x48] sm:$0xff]
        %v412 = vld [vmem:[#allocation6 + $0x50] sm:$0xff]
        %v413 = vld [vmem:[#allocation6 + $0x58] sm:$0xff]
        %v414 = vld [vmem:[#allocation6 + $0x60] sm:$0xff]
        %v415 = vld [vmem:[#allocation6 + $0x68] sm:$0xff]
        %v416 = vld [vmem:[#allocation6 + $0x70] sm:$0xff]
        %v417 = vld [vmem:[#allocation6 + $0x78] sm:$0xff]
        %v418 = vld [vmem:[#allocation6 + $0x80] sm:$0xff]
        %v419 = vld [vmem:[#allocation6 + $0x88] sm:$0xff]
        %v420 = vld [vmem:[#allocation6 + $0x90] sm:$0xff]
        %v421 = vld [vmem:[#allocation6 + $0x98] sm:$0xff]
        %v422 = vld [vmem:[#allocation6 + $0xa0] sm:$0xff]
        %v423 = vld [vmem:[#allocation6 + $0xa8] sm:$0xff]
        %v424 = vld [vmem:[#allocation6 + $0xb0] sm:$0xff]
        %v425 = vld [vmem:[#allocation6 + $0xb8] sm:$0xff]
        %v426 = vld [vmem:[#allocation6 + $0xc0] sm:$0xff]
        %v427 = vld [vmem:[#allocation6 + $0xc8] sm:$0xff]
        %v428 = vld [vmem:[#allocation6 + $0xd0] sm:$0xff]
        %v429 = vld [vmem:[#allocation6 + $0xd8] sm:$0xff]
        %v430 = vld [vmem:[#allocation6 + $0xe0] sm:$0xff]
        %v431 = vld [vmem:[#allocation6 + $0xe8] sm:$0xff]
        %v432 = vld [vmem:[#allocation6 + $0xf0] sm:$0xff]
        %v433 = vld [vmem:[#allocation6 + $0xf8] sm:$0xff]
        %v434 = vld [vmem:[#allocation8] sm:$0xf]
        %v436 = vperm.slane %v434, 0
        %v437 = vperm.slane %v434, 1
        %v438 = vperm.slane %v434, 2
        %v439 = vperm.slane %v434, 3
        %v476 = vunpack.c.l.b16 %v402
        %v477 = vunpack.c.h.b16 %v402
        %v478 = vunpack.c.l.b16 %v403
        %v479 = vunpack.c.h.b16 %v403
        %v480 = vunpack.c.l.b16 %v404
        %v481 = vunpack.c.h.b16 %v404
        %v482 = vunpack.c.l.b16 %v405
        %v483 = vunpack.c.h.b16 %v405
        %v484 = vunpack.c.l.b16 %v406
        %v485 = vunpack.c.h.b16 %v406
        %v486 = vunpack.c.l.b16 %v407
        %v487 = vunpack.c.h.b16 %v407
        %v488 = vunpack.c.l.b16 %v408
        %v489 = vunpack.c.h.b16 %v408
        %v490 = vunpack.c.l.b16 %v409
        %v491 = vunpack.c.h.b16 %v409
        %v492 = vunpack.c.l.b16 %v410
        %v493 = vunpack.c.h.b16 %v410
        %v494 = vunpack.c.l.b16 %v411
        %v495 = vunpack.c.h.b16 %v411
        %v496 = vunpack.c.l.b16 %v412
        %v497 = vunpack.c.h.b16 %v412
        %v498 = vunpack.c.l.b16 %v413
        %v499 = vunpack.c.h.b16 %v413
        %v500 = vunpack.c.l.b16 %v414
        %v501 = vunpack.c.h.b16 %v414
        %v502 = vunpack.c.l.b16 %v415
        %v503 = vunpack.c.h.b16 %v415
        %v504 = vunpack.c.l.b16 %v416
        %v505 = vunpack.c.h.b16 %v416
        %v506 = vunpack.c.l.b16 %v417
        %v507 = vunpack.c.h.b16 %v417
        %v508 = vunpack.c.l.b16 %v418
        %v509 = vunpack.c.h.b16 %v418
        %v510 = vunpack.c.l.b16 %v419
        %v511 = vunpack.c.h.b16 %v419
        %v512 = vunpack.c.l.b16 %v420
        %v513 = vunpack.c.h.b16 %v420
        %v514 = vunpack.c.l.b16 %v421
        %v515 = vunpack.c.h.b16 %v421
        %v516 = vunpack.c.l.b16 %v422
        %v517 = vunpack.c.h.b16 %v422
        %v518 = vunpack.c.l.b16 %v423
        %v519 = vunpack.c.h.b16 %v423
        %v520 = vunpack.c.l.b16 %v424
        %v521 = vunpack.c.h.b16 %v424
        %v522 = vunpack.c.l.b16 %v425
        %v523 = vunpack.c.h.b16 %v425
        %v524 = vunpack.c.l.b16 %v426
        %v525 = vunpack.c.h.b16 %v426
        %v526 = vunpack.c.l.b16 %v427
        %v527 = vunpack.c.h.b16 %v427
        %v528 = vunpack.c.l.b16 %v428
        %v529 = vunpack.c.h.b16 %v428
        %v530 = vunpack.c.l.b16 %v429
        %v531 = vunpack.c.h.b16 %v429
        %v532 = vunpack.c.l.b16 %v430
        %v533 = vunpack.c.h.b16 %v430
        %v534 = vunpack.c.l.b16 %v431
        %v535 = vunpack.c.h.b16 %v431
        %v536 = vunpack.c.l.b16 %v432
        %v537 = vunpack.c.h.b16 %v432
        %v538 = vunpack.c.l.b16 %v433
        %v539 = vunpack.c.h.b16 %v433
        %v540 = vpack.c.b16 %v480, %v476
        %v541 = vpack.c.b16 %v481, %v477
        %v542 = vpack.c.b16 %v482, %v478
        %v543 = vpack.c.b16 %v483, %v479
        %v544 = vpack.c.b16 %v488, %v484
        %v545 = vpack.c.b16 %v489, %v485
        %v546 = vpack.c.b16 %v490, %v486
        %v547 = vpack.c.b16 %v491, %v487
        %v548 = vpack.c.b16 %v496, %v492
        %v549 = vpack.c.b16 %v497, %v493
        %v550 = vpack.c.b16 %v498, %v494
        %v551 = vpack.c.b16 %v499, %v495
        %v552 = vpack.c.b16 %v504, %v500
        %v553 = vpack.c.b16 %v505, %v501
        %v554 = vpack.c.b16 %v506, %v502
        %v555 = vpack.c.b16 %v507, %v503
        %v556 = vpack.c.b16 %v512, %v508
        %v557 = vpack.c.b16 %v513, %v509
        %v558 = vpack.c.b16 %v514, %v510
        %v559 = vpack.c.b16 %v515, %v511
        %v560 = vpack.c.b16 %v520, %v516
        %v561 = vpack.c.b16 %v521, %v517
        %v562 = vpack.c.b16 %v522, %v518
        %v563 = vpack.c.b16 %v523, %v519
        %v564 = vpack.c.b16 %v528, %v524
        %v565 = vpack.c.b16 %v529, %v525
        %v566 = vpack.c.b16 %v530, %v526
        %v567 = vpack.c.b16 %v531, %v527
        %v568 = vpack.c.b16 %v536, %v532
        %v569 = vpack.c.b16 %v537, %v533
        %v570 = vpack.c.b16 %v538, %v534
        %v571 = vpack.c.b16 %v539, %v535
        %604 = vmatpush.bf16.msra.mxu0 %v568
        %605 = vmatpush.bf16.msra.mxu0 %v564
        %606 = vmatpush.bf16.msra.mxu0 %v560
        %607 = vmatpush.bf16.msra.mxu0 %v556
        %608 = vmatpush.bf16.msra.mxu0 %v552
        %609 = vmatpush.bf16.msra.mxu0 %v548
        %610 = vmatpush.bf16.msra.mxu0 %v544
        %611 = vmatpush.bf16.msra.mxu0 %v540
        %612 = vmatmul.bf16.gmra.mxu0 %v394
        %v613 = vpop.f32.mrf.mxu0
        %v614 = vadd.f32 %v436, %v613
        %v615 = vpop.f32.mrf.mxu0
        %v616 = vadd.f32 %v436, %v615
        %617 = vmatmul.bf16.gmra.mxu0 %v395
        %v618 = vpop.f32.mrf.mxu0
        %v619 = vadd.f32 %v436, %v618
        %v620 = vpop.f32.mrf.mxu0
        %v621 = vadd.f32 %v436, %v620
        %622 = vmatmul.bf16.gmra.mxu0 %v396
        %v623 = vpop.f32.mrf.mxu0
        %v624 = vadd.f32 %v436, %v623
        %v625 = vpop.f32.mrf.mxu0
        %v626 = vadd.f32 %v436, %v625
        %627 = vmatmul.bf16.gmra.mxu0 %v397
        %v628 = vpop.f32.mrf.mxu0
        %v629 = vadd.f32 %v436, %v628
        %v630 = vpop.f32.mrf.mxu0
        %v631 = vadd.f32 %v436, %v630
        %632 = vmatmul.bf16.gmra.mxu0 %v398
        %v633 = vpop.f32.mrf.mxu0
        %v634 = vadd.f32 %v436, %v633
        %v635 = vpop.f32.mrf.mxu0
        %v636 = vadd.f32 %v436, %v635
        %637 = vmatmul.bf16.gmra.mxu0 %v399
        %v638 = vpop.f32.mrf.mxu0
        %v639 = vadd.f32 %v436, %v638
        %v640 = vpop.f32.mrf.mxu0
        %v641 = vadd.f32 %v436, %v640
        %642 = vmatmul.bf16.gmra.mxu0 %v400
        %v643 = vpop.f32.mrf.mxu0
        %v644 = vadd.f32 %v436, %v643
        %v645 = vpop.f32.mrf.mxu0
        %v646 = vadd.f32 %v436, %v645
        %647 = vmatmul.bf16.gmra.mxu0 %v401
        %v648 = vpop.f32.mrf.mxu0
        %v649 = vadd.f32 %v436, %v648
        %v650 = vpop.f32.mrf.mxu0
        %v651 = vadd.f32 %v436, %v650
        %652 = vdwg.mxu0
        %653 = vmatpush.bf16.msra.mxu0 %v569
        %654 = vmatpush.bf16.msra.mxu0 %v565
        %655 = vmatpush.bf16.msra.mxu0 %v561
        %656 = vmatpush.bf16.msra.mxu0 %v557
        %657 = vmatpush.bf16.msra.mxu0 %v553
        %658 = vmatpush.bf16.msra.mxu0 %v549
        %659 = vmatpush.bf16.msra.mxu0 %v545
        %660 = vmatpush.bf16.msra.mxu0 %v541
        %661 = vmatmul.bf16.gmra.mxu0 %v394
        %v662 = vpop.f32.mrf.mxu0
        %v663 = vadd.f32 %v437, %v662
        %v664 = vpop.f32.mrf.mxu0
        %v665 = vadd.f32 %v437, %v664
        %666 = vmatmul.bf16.gmra.mxu0 %v395
        %v667 = vpop.f32.mrf.mxu0
        %v668 = vadd.f32 %v437, %v667
        %v669 = vpop.f32.mrf.mxu0
        %v670 = vadd.f32 %v437, %v669
        %671 = vmatmul.bf16.gmra.mxu0 %v396
        %v672 = vpop.f32.mrf.mxu0
        %v673 = vadd.f32 %v437, %v672
        %v674 = vpop.f32.mrf.mxu0
        %v675 = vadd.f32 %v437, %v674
        %676 = vmatmul.bf16.gmra.mxu0 %v397
        %v677 = vpop.f32.mrf.mxu0
        %v678 = vadd.f32 %v437, %v677
        %v679 = vpop.f32.mrf.mxu0
        %v680 = vadd.f32 %v437, %v679
        %681 = vmatmul.bf16.gmra.mxu0 %v398
        %v682 = vpop.f32.mrf.mxu0
        %v683 = vadd.f32 %v437, %v682
        %v684 = vpop.f32.mrf.mxu0
        %v685 = vadd.f32 %v437, %v684
        %686 = vmatmul.bf16.gmra.mxu0 %v399
        %v687 = vpop.f32.mrf.mxu0
        %v688 = vadd.f32 %v437, %v687
        %v689 = vpop.f32.mrf.mxu0
        %v690 = vadd.f32 %v437, %v689
        %691 = vmatmul.bf16.gmra.mxu0 %v400
        %v692 = vpop.f32.mrf.mxu0
        %v693 = vadd.f32 %v437, %v692
        %v694 = vpop.f32.mrf.mxu0
        %v695 = vadd.f32 %v437, %v694
        %696 = vmatmul.bf16.gmra.mxu0 %v401
        %v697 = vpop.f32.mrf.mxu0
        %v698 = vadd.f32 %v437, %v697
        %v699 = vpop.f32.mrf.mxu0
        %v700 = vadd.f32 %v437, %v699
        %701 = vdwg.mxu0
        %702 = vmatpush.bf16.msra.mxu0 %v570
        %703 = vmatpush.bf16.msra.mxu0 %v566
        %704 = vmatpush.bf16.msra.mxu0 %v562
        %705 = vmatpush.bf16.msra.mxu0 %v558
        %706 = vmatpush.bf16.msra.mxu0 %v554
        %707 = vmatpush.bf16.msra.mxu0 %v550
        %708 = vmatpush.bf16.msra.mxu0 %v546
        %709 = vmatpush.bf16.msra.mxu0 %v542
        %710 = vmatmul.bf16.gmra.mxu0 %v394
        %v711 = vpop.f32.mrf.mxu0
        %v712 = vadd.f32 %v438, %v711
        %v713 = vpop.f32.mrf.mxu0
        %v714 = vadd.f32 %v438, %v713
        %715 = vmatmul.bf16.gmra.mxu0 %v395
        %v716 = vpop.f32.mrf.mxu0
        %v717 = vadd.f32 %v438, %v716
        %v718 = vpop.f32.mrf.mxu0
        %v719 = vadd.f32 %v438, %v718
        %720 = vmatmul.bf16.gmra.mxu0 %v396
        %v721 = vpop.f32.mrf.mxu0
        %v722 = vadd.f32 %v438, %v721
        %v723 = vpop.f32.mrf.mxu0
        %v724 = vadd.f32 %v438, %v723
        %725 = vmatmul.bf16.gmra.mxu0 %v397
        %v726 = vpop.f32.mrf.mxu0
        %v727 = vadd.f32 %v438, %v726
        %v728 = vpop.f32.mrf.mxu0
        %v729 = vadd.f32 %v438, %v728
        %730 = vmatmul.bf16.gmra.mxu0 %v398
        %v731 = vpop.f32.mrf.mxu0
        %v732 = vadd.f32 %v438, %v731
        %v733 = vpop.f32.mrf.mxu0
        %v734 = vadd.f32 %v438, %v733
        %735 = vmatmul.bf16.gmra.mxu0 %v399
        %v736 = vpop.f32.mrf.mxu0
        %v737 = vadd.f32 %v438, %v736
        %v738 = vpop.f32.mrf.mxu0
        %v739 = vadd.f32 %v438, %v738
        %740 = vmatmul.bf16.gmra.mxu0 %v400
        %v741 = vpop.f32.mrf.mxu0
        %v742 = vadd.f32 %v438, %v741
        %v743 = vpop.f32.mrf.mxu0
        %v744 = vadd.f32 %v438, %v743
        %745 = vmatmul.bf16.gmra.mxu0 %v401
        %v746 = vpop.f32.mrf.mxu0
        %v747 = vadd.f32 %v438, %v746
        %v748 = vpop.f32.mrf.mxu0
        %v749 = vadd.f32 %v438, %v748
        %750 = vdwg.mxu0
        %751 = vmatpush.bf16.msra.mxu0 %v571
        %752 = vmatpush.bf16.msra.mxu0 %v567
        %753 = vmatpush.bf16.msra.mxu0 %v563
        %754 = vmatpush.bf16.msra.mxu0 %v559
        %755 = vmatpush.bf16.msra.mxu0 %v555
        %756 = vmatpush.bf16.msra.mxu0 %v551
        %757 = vmatpush.bf16.msra.mxu0 %v547
        %758 = vmatpush.bf16.msra.mxu0 %v543
        %759 = vmatmul.bf16.gmra.mxu0 %v394
        %v760 = vpop.f32.mrf.mxu0
        %v761 = vadd.f32 %v439, %v760
        %v762 = vpop.f32.mrf.mxu0
        %v763 = vadd.f32 %v439, %v762
        %764 = vmatmul.bf16.gmra.mxu0 %v395
        %v765 = vpop.f32.mrf.mxu0
        %v766 = vadd.f32 %v439, %v765
        %v767 = vpop.f32.mrf.mxu0
        %v768 = vadd.f32 %v439, %v767
        %769 = vmatmul.bf16.gmra.mxu0 %v396
        %v770 = vpop.f32.mrf.mxu0
        %v771 = vadd.f32 %v439, %v770
        %v772 = vpop.f32.mrf.mxu0
        %v773 = vadd.f32 %v439, %v772
        %774 = vmatmul.bf16.gmra.mxu0 %v397
        %v775 = vpop.f32.mrf.mxu0
        %v776 = vadd.f32 %v439, %v775
        %v777 = vpop.f32.mrf.mxu0
        %v778 = vadd.f32 %v439, %v777
        %779 = vmatmul.bf16.gmra.mxu0 %v398
        %v780 = vpop.f32.mrf.mxu0
        %v781 = vadd.f32 %v439, %v780
        %v782 = vpop.f32.mrf.mxu0
        %v783 = vadd.f32 %v439, %v782
        %784 = vmatmul.bf16.gmra.mxu0 %v399
        %v785 = vpop.f32.mrf.mxu0
        %v786 = vadd.f32 %v439, %v785
        %v787 = vpop.f32.mrf.mxu0
        %v788 = vadd.f32 %v439, %v787
        %789 = vmatmul.bf16.gmra.mxu0 %v400
        %v790 = vpop.f32.mrf.mxu0
        %v791 = vadd.f32 %v439, %v790
        %v792 = vpop.f32.mrf.mxu0
        %v793 = vadd.f32 %v439, %v792
        %794 = vmatmul.bf16.gmra.mxu0 %v401
        %v795 = vpop.f32.mrf.mxu0
        %v796 = vadd.f32 %v439, %v795
        %v797 = vpop.f32.mrf.mxu0
        %v798 = vadd.f32 %v439, %v797
        %799 = vdwg.mxu0
        %vm800 = vcmp.ge.f32.partialorder %v614, 0.0
        %vm801 = vcmp.ge.f32.partialorder %v663, 0.0
        %vm802 = vcmp.ge.f32.partialorder %v712, 0.0
        %vm803 = vcmp.ge.f32.partialorder %v761, 0.0
        %vm804 = vcmp.ge.f32.partialorder %v616, 0.0
        %vm805 = vcmp.ge.f32.partialorder %v665, 0.0
        %vm806 = vcmp.ge.f32.partialorder %v714, 0.0
        %vm807 = vcmp.ge.f32.partialorder %v763, 0.0
        %vm808 = vcmp.ge.f32.partialorder %v619, 0.0
        %vm809 = vcmp.ge.f32.partialorder %v668, 0.0
        %vm810 = vcmp.ge.f32.partialorder %v717, 0.0
        %vm811 = vcmp.ge.f32.partialorder %v766, 0.0
        %vm812 = vcmp.ge.f32.partialorder %v621, 0.0
        %vm813 = vcmp.ge.f32.partialorder %v670, 0.0
        %vm814 = vcmp.ge.f32.partialorder %v719, 0.0
        %vm815 = vcmp.ge.f32.partialorder %v768, 0.0
        %vm816 = vcmp.ge.f32.partialorder %v624, 0.0
        %vm817 = vcmp.ge.f32.partialorder %v673, 0.0
        %vm818 = vcmp.ge.f32.partialorder %v722, 0.0
        %vm819 = vcmp.ge.f32.partialorder %v771, 0.0
        %vm820 = vcmp.ge.f32.partialorder %v626, 0.0
        %vm821 = vcmp.ge.f32.partialorder %v675, 0.0
        %vm822 = vcmp.ge.f32.partialorder %v724, 0.0
        %vm823 = vcmp.ge.f32.partialorder %v773, 0.0
        %vm824 = vcmp.ge.f32.partialorder %v629, 0.0
        %vm825 = vcmp.ge.f32.partialorder %v678, 0.0
        %vm826 = vcmp.ge.f32.partialorder %v727, 0.0
        %vm827 = vcmp.ge.f32.partialorder %v776, 0.0
        %vm828 = vcmp.ge.f32.partialorder %v631, 0.0
        %vm829 = vcmp.ge.f32.partialorder %v680, 0.0
        %vm830 = vcmp.ge.f32.partialorder %v729, 0.0
        %vm831 = vcmp.ge.f32.partialorder %v778, 0.0
        %vm832 = vcmp.ge.f32.partialorder %v634, 0.0
        %vm833 = vcmp.ge.f32.partialorder %v683, 0.0
        %vm834 = vcmp.ge.f32.partialorder %v732, 0.0
        %vm835 = vcmp.ge.f32.partialorder %v781, 0.0
        %vm836 = vcmp.ge.f32.partialorder %v636, 0.0
        %vm837 = vcmp.ge.f32.partialorder %v685, 0.0
        %vm838 = vcmp.ge.f32.partialorder %v734, 0.0
        %vm839 = vcmp.ge.f32.partialorder %v783, 0.0
        %vm840 = vcmp.ge.f32.partialorder %v639, 0.0
        %vm841 = vcmp.ge.f32.partialorder %v688, 0.0
        %vm842 = vcmp.ge.f32.partialorder %v737, 0.0
        %vm843 = vcmp.ge.f32.partialorder %v786, 0.0
        %vm844 = vcmp.ge.f32.partialorder %v641, 0.0
        %vm845 = vcmp.ge.f32.partialorder %v690, 0.0
        %vm846 = vcmp.ge.f32.partialorder %v739, 0.0
        %vm847 = vcmp.ge.f32.partialorder %v788, 0.0
        %vm848 = vcmp.ge.f32.partialorder %v644, 0.0
        %vm849 = vcmp.ge.f32.partialorder %v693, 0.0
        %vm850 = vcmp.ge.f32.partialorder %v742, 0.0
        %vm851 = vcmp.ge.f32.partialorder %v791, 0.0
        %vm852 = vcmp.ge.f32.partialorder %v646, 0.0
        %vm853 = vcmp.ge.f32.partialorder %v695, 0.0
        %vm854 = vcmp.ge.f32.partialorder %v744, 0.0
        %vm855 = vcmp.ge.f32.partialorder %v793, 0.0
        %vm856 = vcmp.ge.f32.partialorder %v649, 0.0
        %vm857 = vcmp.ge.f32.partialorder %v698, 0.0
        %vm858 = vcmp.ge.f32.partialorder %v747, 0.0
        %vm859 = vcmp.ge.f32.partialorder %v796, 0.0
        %vm860 = vcmp.ge.f32.partialorder %v651, 0.0
        %vm861 = vcmp.ge.f32.partialorder %v700, 0.0
        %vm862 = vcmp.ge.f32.partialorder %v749, 0.0
        %vm863 = vcmp.ge.f32.partialorder %v798, 0.0
        %v864 = vmul.f32 %v614, 0.2
        %v865 = vmul.f32 %v663, 0.2
        %v866 = vmul.f32 %v712, 0.2
        %v867 = vmul.f32 %v761, 0.2
        %v868 = vmul.f32 %v616, 0.2
        %v869 = vmul.f32 %v665, 0.2
        %v870 = vmul.f32 %v714, 0.2
        %v871 = vmul.f32 %v763, 0.2
        %v872 = vmul.f32 %v619, 0.2
        %v873 = vmul.f32 %v668, 0.2
        %v874 = vmul.f32 %v717, 0.2
        %v875 = vmul.f32 %v766, 0.2
        %v876 = vmul.f32 %v621, 0.2
        %v877 = vmul.f32 %v670, 0.2
        %v878 = vmul.f32 %v719, 0.2
        %v879 = vmul.f32 %v768, 0.2
        %v880 = vmul.f32 %v624, 0.2
        %v881 = vmul.f32 %v673, 0.2
        %v882 = vmul.f32 %v722, 0.2
        %v883 = vmul.f32 %v771, 0.2
        %v884 = vmul.f32 %v626, 0.2
        %v885 = vmul.f32 %v675, 0.2
        %v886 = vmul.f32 %v724, 0.2
        %v887 = vmul.f32 %v773, 0.2
        %v888 = vmul.f32 %v629, 0.2
        %v889 = vmul.f32 %v678, 0.2
        %v890 = vmul.f32 %v727, 0.2
        %v891 = vmul.f32 %v776, 0.2
        %v892 = vmul.f32 %v631, 0.2
        %v893 = vmul.f32 %v680, 0.2
        %v894 = vmul.f32 %v729, 0.2
        %v895 = vmul.f32 %v778, 0.2
        %v896 = vmul.f32 %v634, 0.2
        %v897 = vmul.f32 %v683, 0.2
        %v898 = vmul.f32 %v732, 0.2
        %v899 = vmul.f32 %v781, 0.2
        %v900 = vmul.f32 %v636, 0.2
        %v901 = vmul.f32 %v685, 0.2
        %v902 = vmul.f32 %v734, 0.2
        %v903 = vmul.f32 %v783, 0.2
        %v904 = vmul.f32 %v639, 0.2
        %v905 = vmul.f32 %v688, 0.2
        %v906 = vmul.f32 %v737, 0.2
        %v907 = vmul.f32 %v786, 0.2
        %v908 = vmul.f32 %v641, 0.2
        %v909 = vmul.f32 %v690, 0.2
        %v910 = vmul.f32 %v739, 0.2
        %v911 = vmul.f32 %v788, 0.2
        %v912 = vmul.f32 %v644, 0.2
        %v913 = vmul.f32 %v693, 0.2
        %v914 = vmul.f32 %v742, 0.2
        %v915 = vmul.f32 %v791, 0.2
        %v916 = vmul.f32 %v646, 0.2
        %v917 = vmul.f32 %v695, 0.2
        %v918 = vmul.f32 %v744, 0.2
        %v919 = vmul.f32 %v793, 0.2
        %v920 = vmul.f32 %v649, 0.2
        %v921 = vmul.f32 %v698, 0.2
        %v922 = vmul.f32 %v747, 0.2
        %v923 = vmul.f32 %v796, 0.2
        %v924 = vmul.f32 %v651, 0.2
        %v925 = vmul.f32 %v700, 0.2
        %v926 = vmul.f32 %v749, 0.2
        %v927 = vmul.f32 %v798, 0.2
        %v928 = vsel %vm800, %v614, %v864
        %v929 = vsel %vm801, %v663, %v865
        %v930 = vsel %vm802, %v712, %v866
        %v931 = vsel %vm803, %v761, %v867
        %v932 = vsel %vm804, %v616, %v868
        %v933 = vsel %vm805, %v665, %v869
        %v934 = vsel %vm806, %v714, %v870
        %v935 = vsel %vm807, %v763, %v871
        %v936 = vsel %vm808, %v619, %v872
        %v937 = vsel %vm809, %v668, %v873
        %v938 = vsel %vm810, %v717, %v874
        %v939 = vsel %vm811, %v766, %v875
        %v940 = vsel %vm812, %v621, %v876
        %v941 = vsel %vm813, %v670, %v877
        %v942 = vsel %vm814, %v719, %v878
        %v943 = vsel %vm815, %v768, %v879
        %v944 = vsel %vm816, %v624, %v880
        %v945 = vsel %vm817, %v673, %v881
        %v946 = vsel %vm818, %v722, %v882
        %v947 = vsel %vm819, %v771, %v883
        %v948 = vsel %vm820, %v626, %v884
        %v949 = vsel %vm821, %v675, %v885
        %v950 = vsel %vm822, %v724, %v886
        %v951 = vsel %vm823, %v773, %v887
        %v952 = vsel %vm824, %v629, %v888
        %v953 = vsel %vm825, %v678, %v889
        %v954 = vsel %vm826, %v727, %v890
        %v955 = vsel %vm827, %v776, %v891
        %v956 = vsel %vm828, %v631, %v892
        %v957 = vsel %vm829, %v680, %v893
        %v958 = vsel %vm830, %v729, %v894
        %v959 = vsel %vm831, %v778, %v895
        %v960 = vsel %vm832, %v634, %v896
        %v961 = vsel %vm833, %v683, %v897
        %v962 = vsel %vm834, %v732, %v898
        %v963 = vsel %vm835, %v781, %v899
        %v964 = vsel %vm836, %v636, %v900
        %v965 = vsel %vm837, %v685, %v901
        %v966 = vsel %vm838, %v734, %v902
        %v967 = vsel %vm839, %v783, %v903
        %v968 = vsel %vm840, %v639, %v904
        %v969 = vsel %vm841, %v688, %v905
        %v970 = vsel %vm842, %v737, %v906
        %v971 = vsel %vm843, %v786, %v907
        %v972 = vsel %vm844, %v641, %v908
        %v973 = vsel %vm845, %v690, %v909
        %v974 = vsel %vm846, %v739, %v910
        %v975 = vsel %vm847, %v788, %v911
        %v976 = vsel %vm848, %v644, %v912
        %v977 = vsel %vm849, %v693, %v913
        %v978 = vsel %vm850, %v742, %v914
        %v979 = vsel %vm851, %v791, %v915
        %v980 = vsel %vm852, %v646, %v916
        %v981 = vsel %vm853, %v695, %v917
        %v982 = vsel %vm854, %v744, %v918
        %v983 = vsel %vm855, %v793, %v919
        %v984 = vsel %vm856, %v649, %v920
        %v985 = vsel %vm857, %v698, %v921
        %v986 = vsel %vm858, %v747, %v922
        %v987 = vsel %vm859, %v796, %v923
        %v988 = vsel %vm860, %v651, %v924
        %v989 = vsel %vm861, %v700, %v925
        %v990 = vsel %vm862, %v749, %v926
        %v991 = vsel %vm863, %v798, %v927
        %v992 = vpack.c.bf16 %v932, %v928
        %v993 = vpack.c.bf16 %v933, %v929
        %v994 = vpack.c.bf16 %v934, %v930
        %v995 = vpack.c.bf16 %v935, %v931
        %v996 = vpack.c.bf16 %v940, %v936
        %v997 = vpack.c.bf16 %v941, %v937
        %v998 = vpack.c.bf16 %v942, %v938
        %v999 = vpack.c.bf16 %v943, %v939
        %v1000 = vpack.c.bf16 %v948, %v944
        %v1001 = vpack.c.bf16 %v949, %v945
        %v1002 = vpack.c.bf16 %v950, %v946
        %v1003 = vpack.c.bf16 %v951, %v947
        %v1004 = vpack.c.bf16 %v956, %v952
        %v1005 = vpack.c.bf16 %v957, %v953
        %v1006 = vpack.c.bf16 %v958, %v954
        %v1007 = vpack.c.bf16 %v959, %v955
        %v1008 = vpack.c.bf16 %v964, %v960
        %v1009 = vpack.c.bf16 %v965, %v961
        %v1010 = vpack.c.bf16 %v966, %v962
        %v1011 = vpack.c.bf16 %v967, %v963
        %v1012 = vpack.c.bf16 %v972, %v968
        %v1013 = vpack.c.bf16 %v973, %v969
        %v1014 = vpack.c.bf16 %v974, %v970
        %v1015 = vpack.c.bf16 %v975, %v971
        %v1016 = vpack.c.bf16 %v980, %v976
        %v1017 = vpack.c.bf16 %v981, %v977
        %v1018 = vpack.c.bf16 %v982, %v978
        %v1019 = vpack.c.bf16 %v983, %v979
        %v1020 = vpack.c.bf16 %v988, %v984
        %v1021 = vpack.c.bf16 %v989, %v985
        %v1022 = vpack.c.bf16 %v990, %v986
        %v1023 = vpack.c.bf16 %v991, %v987
        %v1024 = vld [vmem:[#allocation9] sm:$0xff]
        %v1025 = vld [vmem:[#allocation9 + $0x8] sm:$0xff]
        %v1026 = vld [vmem:[#allocation9 + $0x10] sm:$0xff]
        %v1027 = vld [vmem:[#allocation9 + $0x18] sm:$0xff]
        %v1028 = vld [vmem:[#allocation9 + $0x20] sm:$0xff]
        %v1029 = vld [vmem:[#allocation9 + $0x28] sm:$0xff]
        %v1030 = vld [vmem:[#allocation9 + $0x30] sm:$0xff]
        %v1031 = vld [vmem:[#allocation9 + $0x38] sm:$0xff]
        %v1032 = vld [vmem:[#allocation9 + $0x40] sm:$0xff]
        %v1033 = vld [vmem:[#allocation9 + $0x48] sm:$0xff]
        %v1034 = vld [vmem:[#allocation9 + $0x50] sm:$0xff]
        %v1035 = vld [vmem:[#allocation9 + $0x58] sm:$0xff]
        %v1036 = vld [vmem:[#allocation9 + $0x60] sm:$0xff]
        %v1037 = vld [vmem:[#allocation9 + $0x68] sm:$0xff]
        %v1038 = vld [vmem:[#allocation9 + $0x70] sm:$0xff]
        %v1039 = vld [vmem:[#allocation9 + $0x78] sm:$0xff]
        %v1040 = vld [vmem:[#allocation9 + $0x80] sm:$0xff]
        %v1041 = vld [vmem:[#allocation9 + $0x88] sm:$0xff]
        %v1042 = vld [vmem:[#allocation9 + $0x90] sm:$0xff]
        %v1043 = vld [vmem:[#allocation9 + $0x98] sm:$0xff]
        %v1044 = vld [vmem:[#allocation9 + $0xa0] sm:$0xff]
        %v1045 = vld [vmem:[#allocation9 + $0xa8] sm:$0xff]
        %v1046 = vld [vmem:[#allocation9 + $0xb0] sm:$0xff]
        %v1047 = vld [vmem:[#allocation9 + $0xb8] sm:$0xff]
        %v1048 = vld [vmem:[#allocation9 + $0xc0] sm:$0xff]
        %v1049 = vld [vmem:[#allocation9 + $0xc8] sm:$0xff]
        %v1050 = vld [vmem:[#allocation9 + $0xd0] sm:$0xff]
        %v1051 = vld [vmem:[#allocation9 + $0xd8] sm:$0xff]
        %v1052 = vld [vmem:[#allocation9 + $0xe0] sm:$0xff]
        %v1053 = vld [vmem:[#allocation9 + $0xe8] sm:$0xff]
        %v1054 = vld [vmem:[#allocation9 + $0xf0] sm:$0xff]
        %v1055 = vld [vmem:[#allocation9 + $0xf8] sm:$0xff]
        %v1056 = vld [vmem:[#allocation9 + $0x100] sm:$0xff]
        %v1057 = vld [vmem:[#allocation9 + $0x108] sm:$0xff]
        %v1058 = vld [vmem:[#allocation9 + $0x110] sm:$0xff]
        %v1059 = vld [vmem:[#allocation9 + $0x118] sm:$0xff]
        %v1060 = vld [vmem:[#allocation9 + $0x120] sm:$0xff]
        %v1061 = vld [vmem:[#allocation9 + $0x128] sm:$0xff]
        %v1062 = vld [vmem:[#allocation9 + $0x130] sm:$0xff]
        %v1063 = vld [vmem:[#allocation9 + $0x138] sm:$0xff]
        %v1064 = vld [vmem:[#allocation9 + $0x140] sm:$0xff]
        %v1065 = vld [vmem:[#allocation9 + $0x148] sm:$0xff]
        %v1066 = vld [vmem:[#allocation9 + $0x150] sm:$0xff]
        %v1067 = vld [vmem:[#allocation9 + $0x158] sm:$0xff]
        %v1068 = vld [vmem:[#allocation9 + $0x160] sm:$0xff]
        %v1069 = vld [vmem:[#allocation9 + $0x168] sm:$0xff]
        %v1070 = vld [vmem:[#allocation9 + $0x170] sm:$0xff]
        %v1071 = vld [vmem:[#allocation9 + $0x178] sm:$0xff]
        %v1072 = vld [vmem:[#allocation9 + $0x180] sm:$0xff]
        %v1073 = vld [vmem:[#allocation9 + $0x188] sm:$0xff]
        %v1074 = vld [vmem:[#allocation9 + $0x190] sm:$0xff]
        %v1075 = vld [vmem:[#allocation9 + $0x198] sm:$0xff]
        %v1076 = vld [vmem:[#allocation9 + $0x1a0] sm:$0xff]
        %v1077 = vld [vmem:[#allocation9 + $0x1a8] sm:$0xff]
        %v1078 = vld [vmem:[#allocation9 + $0x1b0] sm:$0xff]
        %v1079 = vld [vmem:[#allocation9 + $0x1b8] sm:$0xff]
        %v1080 = vld [vmem:[#allocation9 + $0x1c0] sm:$0xff]
        %v1081 = vld [vmem:[#allocation9 + $0x1c8] sm:$0xff]
        %v1082 = vld [vmem:[#allocation9 + $0x1d0] sm:$0xff]
        %v1083 = vld [vmem:[#allocation9 + $0x1d8] sm:$0xff]
        %v1084 = vld [vmem:[#allocation9 + $0x1e0] sm:$0xff]
        %v1085 = vld [vmem:[#allocation9 + $0x1e8] sm:$0xff]
        %v1086 = vld [vmem:[#allocation9 + $0x1f0] sm:$0xff]
        %v1087 = vld [vmem:[#allocation9 + $0x1f8] sm:$0xff]
        %v1088 = vld [vmem:[#allocation9 + $0x200] sm:$0xff]
        %v1089 = vld [vmem:[#allocation9 + $0x208] sm:$0xff]
        %v1090 = vld [vmem:[#allocation9 + $0x210] sm:$0xff]
        %v1091 = vld [vmem:[#allocation9 + $0x218] sm:$0xff]
        %v1092 = vld [vmem:[#allocation9 + $0x220] sm:$0xff]
        %v1093 = vld [vmem:[#allocation9 + $0x228] sm:$0xff]
        %v1094 = vld [vmem:[#allocation9 + $0x230] sm:$0xff]
        %v1095 = vld [vmem:[#allocation9 + $0x238] sm:$0xff]
        %v1096 = vld [vmem:[#allocation9 + $0x240] sm:$0xff]
        %v1097 = vld [vmem:[#allocation9 + $0x248] sm:$0xff]
        %v1098 = vld [vmem:[#allocation9 + $0x250] sm:$0xff]
        %v1099 = vld [vmem:[#allocation9 + $0x258] sm:$0xff]
        %v1100 = vld [vmem:[#allocation9 + $0x260] sm:$0xff]
        %v1101 = vld [vmem:[#allocation9 + $0x268] sm:$0xff]
        %v1102 = vld [vmem:[#allocation9 + $0x270] sm:$0xff]
        %v1103 = vld [vmem:[#allocation9 + $0x278] sm:$0xff]
        %v1104 = vld [vmem:[#allocation9 + $0x280] sm:$0xff]
        %v1105 = vld [vmem:[#allocation9 + $0x288] sm:$0xff]
        %v1106 = vld [vmem:[#allocation9 + $0x290] sm:$0xff]
        %v1107 = vld [vmem:[#allocation9 + $0x298] sm:$0xff]
        %v1108 = vld [vmem:[#allocation9 + $0x2a0] sm:$0xff]
        %v1109 = vld [vmem:[#allocation9 + $0x2a8] sm:$0xff]
        %v1110 = vld [vmem:[#allocation9 + $0x2b0] sm:$0xff]
        %v1111 = vld [vmem:[#allocation9 + $0x2b8] sm:$0xff]
        %v1112 = vld [vmem:[#allocation9 + $0x2c0] sm:$0xff]
        %v1113 = vld [vmem:[#allocation9 + $0x2c8] sm:$0xff]
        %v1114 = vld [vmem:[#allocation9 + $0x2d0] sm:$0xff]
        %v1115 = vld [vmem:[#allocation9 + $0x2d8] sm:$0xff]
        %v1116 = vld [vmem:[#allocation9 + $0x2e0] sm:$0xff]
        %v1117 = vld [vmem:[#allocation9 + $0x2e8] sm:$0xff]
        %v1118 = vld [vmem:[#allocation9 + $0x2f0] sm:$0xff]
        %v1119 = vld [vmem:[#allocation9 + $0x2f8] sm:$0xff]
        %v1120 = vld [vmem:[#allocation9 + $0x300] sm:$0xff]
        %v1121 = vld [vmem:[#allocation9 + $0x308] sm:$0xff]
        %v1122 = vld [vmem:[#allocation9 + $0x310] sm:$0xff]
        %v1123 = vld [vmem:[#allocation9 + $0x318] sm:$0xff]
        %v1124 = vld [vmem:[#allocation9 + $0x320] sm:$0xff]
        %v1125 = vld [vmem:[#allocation9 + $0x328] sm:$0xff]
        %v1126 = vld [vmem:[#allocation9 + $0x330] sm:$0xff]
        %v1127 = vld [vmem:[#allocation9 + $0x338] sm:$0xff]
        %v1128 = vld [vmem:[#allocation9 + $0x340] sm:$0xff]
        %v1129 = vld [vmem:[#allocation9 + $0x348] sm:$0xff]
        %v1130 = vld [vmem:[#allocation9 + $0x350] sm:$0xff]
        %v1131 = vld [vmem:[#allocation9 + $0x358] sm:$0xff]
        %v1132 = vld [vmem:[#allocation9 + $0x360] sm:$0xff]
        %v1133 = vld [vmem:[#allocation9 + $0x368] sm:$0xff]
        %v1134 = vld [vmem:[#allocation9 + $0x370] sm:$0xff]
        %v1135 = vld [vmem:[#allocation9 + $0x378] sm:$0xff]
        %v1136 = vld [vmem:[#allocation9 + $0x380] sm:$0xff]
        %v1137 = vld [vmem:[#allocation9 + $0x388] sm:$0xff]
        %v1138 = vld [vmem:[#allocation9 + $0x390] sm:$0xff]
        %v1139 = vld [vmem:[#allocation9 + $0x398] sm:$0xff]
        %v1140 = vld [vmem:[#allocation9 + $0x3a0] sm:$0xff]
        %v1141 = vld [vmem:[#allocation9 + $0x3a8] sm:$0xff]
        %v1142 = vld [vmem:[#allocation9 + $0x3b0] sm:$0xff]
        %v1143 = vld [vmem:[#allocation9 + $0x3b8] sm:$0xff]
        %v1144 = vld [vmem:[#allocation9 + $0x3c0] sm:$0xff]
        %v1145 = vld [vmem:[#allocation9 + $0x3c8] sm:$0xff]
        %v1146 = vld [vmem:[#allocation9 + $0x3d0] sm:$0xff]
        %v1147 = vld [vmem:[#allocation9 + $0x3d8] sm:$0xff]
        %v1148 = vld [vmem:[#allocation9 + $0x3e0] sm:$0xff]
        %v1149 = vld [vmem:[#allocation9 + $0x3e8] sm:$0xff]
        %v1150 = vld [vmem:[#allocation9 + $0x3f0] sm:$0xff]
        %v1151 = vld [vmem:[#allocation9 + $0x3f8] sm:$0xff]
        %v1152 = vld [vmem:[#allocation11] sm:$0xf]
        %v1154 = vperm.slane %v1152, 0
        %v1155 = vperm.slane %v1152, 1
        %v1156 = vperm.slane %v1152, 2
        %v1157 = vperm.slane %v1152, 3
        %v1290 = vunpack.c.l.b16 %v1024
        %v1291 = vunpack.c.h.b16 %v1024
        %v1292 = vunpack.c.l.b16 %v1025
        %v1293 = vunpack.c.h.b16 %v1025
        %v1294 = vunpack.c.l.b16 %v1026
        %v1295 = vunpack.c.h.b16 %v1026
        %v1296 = vunpack.c.l.b16 %v1027
        %v1297 = vunpack.c.h.b16 %v1027
        %v1298 = vunpack.c.l.b16 %v1028
        %v1299 = vunpack.c.h.b16 %v1028
        %v1300 = vunpack.c.l.b16 %v1029
        %v1301 = vunpack.c.h.b16 %v1029
        %v1302 = vunpack.c.l.b16 %v1030
        %v1303 = vunpack.c.h.b16 %v1030
        %v1304 = vunpack.c.l.b16 %v1031
        %v1305 = vunpack.c.h.b16 %v1031
        %v1306 = vunpack.c.l.b16 %v1032
        %v1307 = vunpack.c.h.b16 %v1032
        %v1308 = vunpack.c.l.b16 %v1033
        %v1309 = vunpack.c.h.b16 %v1033
        %v1310 = vunpack.c.l.b16 %v1034
        %v1311 = vunpack.c.h.b16 %v1034
        %v1312 = vunpack.c.l.b16 %v1035
        %v1313 = vunpack.c.h.b16 %v1035
        %v1314 = vunpack.c.l.b16 %v1036
        %v1315 = vunpack.c.h.b16 %v1036
        %v1316 = vunpack.c.l.b16 %v1037
        %v1317 = vunpack.c.h.b16 %v1037
        %v1318 = vunpack.c.l.b16 %v1038
        %v1319 = vunpack.c.h.b16 %v1038
        %v1320 = vunpack.c.l.b16 %v1039
        %v1321 = vunpack.c.h.b16 %v1039
        %v1322 = vunpack.c.l.b16 %v1040
        %v1323 = vunpack.c.h.b16 %v1040
        %v1324 = vunpack.c.l.b16 %v1041
        %v1325 = vunpack.c.h.b16 %v1041
        %v1326 = vunpack.c.l.b16 %v1042
        %v1327 = vunpack.c.h.b16 %v1042
        %v1328 = vunpack.c.l.b16 %v1043
        %v1329 = vunpack.c.h.b16 %v1043
        %v1330 = vunpack.c.l.b16 %v1044
        %v1331 = vunpack.c.h.b16 %v1044
        %v1332 = vunpack.c.l.b16 %v1045
        %v1333 = vunpack.c.h.b16 %v1045
        %v1334 = vunpack.c.l.b16 %v1046
        %v1335 = vunpack.c.h.b16 %v1046
        %v1336 = vunpack.c.l.b16 %v1047
        %v1337 = vunpack.c.h.b16 %v1047
        %v1338 = vunpack.c.l.b16 %v1048
        %v1339 = vunpack.c.h.b16 %v1048
        %v1340 = vunpack.c.l.b16 %v1049
        %v1341 = vunpack.c.h.b16 %v1049
        %v1342 = vunpack.c.l.b16 %v1050
        %v1343 = vunpack.c.h.b16 %v1050
        %v1344 = vunpack.c.l.b16 %v1051
        %v1345 = vunpack.c.h.b16 %v1051
        %v1346 = vunpack.c.l.b16 %v1052
        %v1347 = vunpack.c.h.b16 %v1052
        %v1348 = vunpack.c.l.b16 %v1053
        %v1349 = vunpack.c.h.b16 %v1053
        %v1350 = vunpack.c.l.b16 %v1054
        %v1351 = vunpack.c.h.b16 %v1054
        %v1352 = vunpack.c.l.b16 %v1055
        %v1353 = vunpack.c.h.b16 %v1055
        %v1354 = vunpack.c.l.b16 %v1056
        %v1355 = vunpack.c.h.b16 %v1056
        %v1356 = vunpack.c.l.b16 %v1057
        %v1357 = vunpack.c.h.b16 %v1057
        %v1358 = vunpack.c.l.b16 %v1058
        %v1359 = vunpack.c.h.b16 %v1058
        %v1360 = vunpack.c.l.b16 %v1059
        %v1361 = vunpack.c.h.b16 %v1059
        %v1362 = vunpack.c.l.b16 %v1060
        %v1363 = vunpack.c.h.b16 %v1060
        %v1364 = vunpack.c.l.b16 %v1061
        %v1365 = vunpack.c.h.b16 %v1061
        %v1366 = vunpack.c.l.b16 %v1062
        %v1367 = vunpack.c.h.b16 %v1062
        %v1368 = vunpack.c.l.b16 %v1063
        %v1369 = vunpack.c.h.b16 %v1063
        %v1370 = vunpack.c.l.b16 %v1064
        %v1371 = vunpack.c.h.b16 %v1064
        %v1372 = vunpack.c.l.b16 %v1065
        %v1373 = vunpack.c.h.b16 %v1065
        %v1374 = vunpack.c.l.b16 %v1066
        %v1375 = vunpack.c.h.b16 %v1066
        %v1376 = vunpack.c.l.b16 %v1067
        %v1377 = vunpack.c.h.b16 %v1067
        %v1378 = vunpack.c.l.b16 %v1068
        %v1379 = vunpack.c.h.b16 %v1068
        %v1380 = vunpack.c.l.b16 %v1069
        %v1381 = vunpack.c.h.b16 %v1069
        %v1382 = vunpack.c.l.b16 %v1070
        %v1383 = vunpack.c.h.b16 %v1070
        %v1384 = vunpack.c.l.b16 %v1071
        %v1385 = vunpack.c.h.b16 %v1071
        %v1386 = vunpack.c.l.b16 %v1072
        %v1387 = vunpack.c.h.b16 %v1072
        %v1388 = vunpack.c.l.b16 %v1073
        %v1389 = vunpack.c.h.b16 %v1073
        %v1390 = vunpack.c.l.b16 %v1074
        %v1391 = vunpack.c.h.b16 %v1074
        %v1392 = vunpack.c.l.b16 %v1075
        %v1393 = vunpack.c.h.b16 %v1075
        %v1394 = vunpack.c.l.b16 %v1076
        %v1395 = vunpack.c.h.b16 %v1076
        %v1396 = vunpack.c.l.b16 %v1077
        %v1397 = vunpack.c.h.b16 %v1077
        %v1398 = vunpack.c.l.b16 %v1078
        %v1399 = vunpack.c.h.b16 %v1078
        %v1400 = vunpack.c.l.b16 %v1079
        %v1401 = vunpack.c.h.b16 %v1079
        %v1402 = vunpack.c.l.b16 %v1080
        %v1403 = vunpack.c.h.b16 %v1080
        %v1404 = vunpack.c.l.b16 %v1081
        %v1405 = vunpack.c.h.b16 %v1081
        %v1406 = vunpack.c.l.b16 %v1082
        %v1407 = vunpack.c.h.b16 %v1082
        %v1408 = vunpack.c.l.b16 %v1083
        %v1409 = vunpack.c.h.b16 %v1083
        %v1410 = vunpack.c.l.b16 %v1084
        %v1411 = vunpack.c.h.b16 %v1084
        %v1412 = vunpack.c.l.b16 %v1085
        %v1413 = vunpack.c.h.b16 %v1085
        %v1414 = vunpack.c.l.b16 %v1086
        %v1415 = vunpack.c.h.b16 %v1086
        %v1416 = vunpack.c.l.b16 %v1087
        %v1417 = vunpack.c.h.b16 %v1087
        %v1418 = vunpack.c.l.b16 %v1088
        %v1419 = vunpack.c.h.b16 %v1088
        %v1420 = vunpack.c.l.b16 %v1089
        %v1421 = vunpack.c.h.b16 %v1089
        %v1422 = vunpack.c.l.b16 %v1090
        %v1423 = vunpack.c.h.b16 %v1090
        %v1424 = vunpack.c.l.b16 %v1091
        %v1425 = vunpack.c.h.b16 %v1091
        %v1426 = vunpack.c.l.b16 %v1092
        %v1427 = vunpack.c.h.b16 %v1092
        %v1428 = vunpack.c.l.b16 %v1093
        %v1429 = vunpack.c.h.b16 %v1093
        %v1430 = vunpack.c.l.b16 %v1094
        %v1431 = vunpack.c.h.b16 %v1094
        %v1432 = vunpack.c.l.b16 %v1095
        %v1433 = vunpack.c.h.b16 %v1095
        %v1434 = vunpack.c.l.b16 %v1096
        %v1435 = vunpack.c.h.b16 %v1096
        %v1436 = vunpack.c.l.b16 %v1097
        %v1437 = vunpack.c.h.b16 %v1097
        %v1438 = vunpack.c.l.b16 %v1098
        %v1439 = vunpack.c.h.b16 %v1098
        %v1440 = vunpack.c.l.b16 %v1099
        %v1441 = vunpack.c.h.b16 %v1099
        %v1442 = vunpack.c.l.b16 %v1100
        %v1443 = vunpack.c.h.b16 %v1100
        %v1444 = vunpack.c.l.b16 %v1101
        %v1445 = vunpack.c.h.b16 %v1101
        %v1446 = vunpack.c.l.b16 %v1102
        %v1447 = vunpack.c.h.b16 %v1102
        %v1448 = vunpack.c.l.b16 %v1103
        %v1449 = vunpack.c.h.b16 %v1103
        %v1450 = vunpack.c.l.b16 %v1104
        %v1451 = vunpack.c.h.b16 %v1104
        %v1452 = vunpack.c.l.b16 %v1105
        %v1453 = vunpack.c.h.b16 %v1105
        %v1454 = vunpack.c.l.b16 %v1106
        %v1455 = vunpack.c.h.b16 %v1106
        %v1456 = vunpack.c.l.b16 %v1107
        %v1457 = vunpack.c.h.b16 %v1107
        %v1458 = vunpack.c.l.b16 %v1108
        %v1459 = vunpack.c.h.b16 %v1108
        %v1460 = vunpack.c.l.b16 %v1109
        %v1461 = vunpack.c.h.b16 %v1109
        %v1462 = vunpack.c.l.b16 %v1110
        %v1463 = vunpack.c.h.b16 %v1110
        %v1464 = vunpack.c.l.b16 %v1111
        %v1465 = vunpack.c.h.b16 %v1111
        %v1466 = vunpack.c.l.b16 %v1112
        %v1467 = vunpack.c.h.b16 %v1112
        %v1468 = vunpack.c.l.b16 %v1113
        %v1469 = vunpack.c.h.b16 %v1113
        %v1470 = vunpack.c.l.b16 %v1114
        %v1471 = vunpack.c.h.b16 %v1114
        %v1472 = vunpack.c.l.b16 %v1115
        %v1473 = vunpack.c.h.b16 %v1115
        %v1474 = vunpack.c.l.b16 %v1116
        %v1475 = vunpack.c.h.b16 %v1116
        %v1476 = vunpack.c.l.b16 %v1117
        %v1477 = vunpack.c.h.b16 %v1117
        %v1478 = vunpack.c.l.b16 %v1118
        %v1479 = vunpack.c.h.b16 %v1118
        %v1480 = vunpack.c.l.b16 %v1119
        %v1481 = vunpack.c.h.b16 %v1119
        %v1482 = vunpack.c.l.b16 %v1120
        %v1483 = vunpack.c.h.b16 %v1120
        %v1484 = vunpack.c.l.b16 %v1121
        %v1485 = vunpack.c.h.b16 %v1121
        %v1486 = vunpack.c.l.b16 %v1122
        %v1487 = vunpack.c.h.b16 %v1122
        %v1488 = vunpack.c.l.b16 %v1123
        %v1489 = vunpack.c.h.b16 %v1123
        %v1490 = vunpack.c.l.b16 %v1124
        %v1491 = vunpack.c.h.b16 %v1124
        %v1492 = vunpack.c.l.b16 %v1125
        %v1493 = vunpack.c.h.b16 %v1125
        %v1494 = vunpack.c.l.b16 %v1126
        %v1495 = vunpack.c.h.b16 %v1126
        %v1496 = vunpack.c.l.b16 %v1127
        %v1497 = vunpack.c.h.b16 %v1127
        %v1498 = vunpack.c.l.b16 %v1128
        %v1499 = vunpack.c.h.b16 %v1128
        %v1500 = vunpack.c.l.b16 %v1129
        %v1501 = vunpack.c.h.b16 %v1129
        %v1502 = vunpack.c.l.b16 %v1130
        %v1503 = vunpack.c.h.b16 %v1130
        %v1504 = vunpack.c.l.b16 %v1131
        %v1505 = vunpack.c.h.b16 %v1131
        %v1506 = vunpack.c.l.b16 %v1132
        %v1507 = vunpack.c.h.b16 %v1132
        %v1508 = vunpack.c.l.b16 %v1133
        %v1509 = vunpack.c.h.b16 %v1133
        %v1510 = vunpack.c.l.b16 %v1134
        %v1511 = vunpack.c.h.b16 %v1134
        %v1512 = vunpack.c.l.b16 %v1135
        %v1513 = vunpack.c.h.b16 %v1135
        %v1514 = vunpack.c.l.b16 %v1136
        %v1515 = vunpack.c.h.b16 %v1136
        %v1516 = vunpack.c.l.b16 %v1137
        %v1517 = vunpack.c.h.b16 %v1137
        %v1518 = vunpack.c.l.b16 %v1138
        %v1519 = vunpack.c.h.b16 %v1138
        %v1520 = vunpack.c.l.b16 %v1139
        %v1521 = vunpack.c.h.b16 %v1139
        %v1522 = vunpack.c.l.b16 %v1140
        %v1523 = vunpack.c.h.b16 %v1140
        %v1524 = vunpack.c.l.b16 %v1141
        %v1525 = vunpack.c.h.b16 %v1141
        %v1526 = vunpack.c.l.b16 %v1142
        %v1527 = vunpack.c.h.b16 %v1142
        %v1528 = vunpack.c.l.b16 %v1143
        %v1529 = vunpack.c.h.b16 %v1143
        %v1530 = vunpack.c.l.b16 %v1144
        %v1531 = vunpack.c.h.b16 %v1144
        %v1532 = vunpack.c.l.b16 %v1145
        %v1533 = vunpack.c.h.b16 %v1145
        %v1534 = vunpack.c.l.b16 %v1146
        %v1535 = vunpack.c.h.b16 %v1146
        %v1536 = vunpack.c.l.b16 %v1147
        %v1537 = vunpack.c.h.b16 %v1147
        %v1538 = vunpack.c.l.b16 %v1148
        %v1539 = vunpack.c.h.b16 %v1148
        %v1540 = vunpack.c.l.b16 %v1149
        %v1541 = vunpack.c.h.b16 %v1149
        %v1542 = vunpack.c.l.b16 %v1150
        %v1543 = vunpack.c.h.b16 %v1150
        %v1544 = vunpack.c.l.b16 %v1151
        %v1545 = vunpack.c.h.b16 %v1151
        %v1546 = vpack.c.b16 %v1294, %v1290
        %v1547 = vpack.c.b16 %v1295, %v1291
        %v1548 = vpack.c.b16 %v1296, %v1292
        %v1549 = vpack.c.b16 %v1297, %v1293
        %v1550 = vpack.c.b16 %v1302, %v1298
        %v1551 = vpack.c.b16 %v1303, %v1299
        %v1552 = vpack.c.b16 %v1304, %v1300
        %v1553 = vpack.c.b16 %v1305, %v1301
        %v1554 = vpack.c.b16 %v1310, %v1306
        %v1555 = vpack.c.b16 %v1311, %v1307
        %v1556 = vpack.c.b16 %v1312, %v1308
        %v1557 = vpack.c.b16 %v1313, %v1309
        %v1558 = vpack.c.b16 %v1318, %v1314
        %v1559 = vpack.c.b16 %v1319, %v1315
        %v1560 = vpack.c.b16 %v1320, %v1316
        %v1561 = vpack.c.b16 %v1321, %v1317
        %v1562 = vpack.c.b16 %v1326, %v1322
        %v1563 = vpack.c.b16 %v1327, %v1323
        %v1564 = vpack.c.b16 %v1328, %v1324
        %v1565 = vpack.c.b16 %v1329, %v1325
        %v1566 = vpack.c.b16 %v1334, %v1330
        %v1567 = vpack.c.b16 %v1335, %v1331
        %v1568 = vpack.c.b16 %v1336, %v1332
        %v1569 = vpack.c.b16 %v1337, %v1333
        %v1570 = vpack.c.b16 %v1342, %v1338
        %v1571 = vpack.c.b16 %v1343, %v1339
        %v1572 = vpack.c.b16 %v1344, %v1340
        %v1573 = vpack.c.b16 %v1345, %v1341
        %v1574 = vpack.c.b16 %v1350, %v1346
        %v1575 = vpack.c.b16 %v1351, %v1347
        %v1576 = vpack.c.b16 %v1352, %v1348
        %v1577 = vpack.c.b16 %v1353, %v1349
        %v1578 = vpack.c.b16 %v1358, %v1354
        %v1579 = vpack.c.b16 %v1359, %v1355
        %v1580 = vpack.c.b16 %v1360, %v1356
        %v1581 = vpack.c.b16 %v1361, %v1357
        %v1582 = vpack.c.b16 %v1366, %v1362
        %v1583 = vpack.c.b16 %v1367, %v1363
        %v1584 = vpack.c.b16 %v1368, %v1364
        %v1585 = vpack.c.b16 %v1369, %v1365
        %v1586 = vpack.c.b16 %v1374, %v1370
        %v1587 = vpack.c.b16 %v1375, %v1371
        %v1588 = vpack.c.b16 %v1376, %v1372
        %v1589 = vpack.c.b16 %v1377, %v1373
        %v1590 = vpack.c.b16 %v1382, %v1378
        %v1591 = vpack.c.b16 %v1383, %v1379
        %v1592 = vpack.c.b16 %v1384, %v1380
        %v1593 = vpack.c.b16 %v1385, %v1381
        %v1594 = vpack.c.b16 %v1390, %v1386
        %v1595 = vpack.c.b16 %v1391, %v1387
        %v1596 = vpack.c.b16 %v1392, %v1388
        %v1597 = vpack.c.b16 %v1393, %v1389
        %v1598 = vpack.c.b16 %v1398, %v1394
        %v1599 = vpack.c.b16 %v1399, %v1395
        %v1600 = vpack.c.b16 %v1400, %v1396
        %v1601 = vpack.c.b16 %v1401, %v1397
        %v1602 = vpack.c.b16 %v1406, %v1402
        %v1603 = vpack.c.b16 %v1407, %v1403
        %v1604 = vpack.c.b16 %v1408, %v1404
        %v1605 = vpack.c.b16 %v1409, %v1405
        %v1606 = vpack.c.b16 %v1414, %v1410
        %v1607 = vpack.c.b16 %v1415, %v1411
        %v1608 = vpack.c.b16 %v1416, %v1412
        %v1609 = vpack.c.b16 %v1417, %v1413
        %v1610 = vpack.c.b16 %v1422, %v1418
        %v1611 = vpack.c.b16 %v1423, %v1419
        %v1612 = vpack.c.b16 %v1424, %v1420
        %v1613 = vpack.c.b16 %v1425, %v1421
        %v1614 = vpack.c.b16 %v1430, %v1426
        %v1615 = vpack.c.b16 %v1431, %v1427
        %v1616 = vpack.c.b16 %v1432, %v1428
        %v1617 = vpack.c.b16 %v1433, %v1429
        %v1618 = vpack.c.b16 %v1438, %v1434
        %v1619 = vpack.c.b16 %v1439, %v1435
        %v1620 = vpack.c.b16 %v1440, %v1436
        %v1621 = vpack.c.b16 %v1441, %v1437
        %v1622 = vpack.c.b16 %v1446, %v1442
        %v1623 = vpack.c.b16 %v1447, %v1443
        %v1624 = vpack.c.b16 %v1448, %v1444
        %v1625 = vpack.c.b16 %v1449, %v1445
        %v1626 = vpack.c.b16 %v1454, %v1450
        %v1627 = vpack.c.b16 %v1455, %v1451
        %v1628 = vpack.c.b16 %v1456, %v1452
        %v1629 = vpack.c.b16 %v1457, %v1453
        %v1630 = vpack.c.b16 %v1462, %v1458
        %v1631 = vpack.c.b16 %v1463, %v1459
        %v1632 = vpack.c.b16 %v1464, %v1460
        %v1633 = vpack.c.b16 %v1465, %v1461
        %v1634 = vpack.c.b16 %v1470, %v1466
        %v1635 = vpack.c.b16 %v1471, %v1467
        %v1636 = vpack.c.b16 %v1472, %v1468
        %v1637 = vpack.c.b16 %v1473, %v1469
        %v1638 = vpack.c.b16 %v1478, %v1474
        %v1639 = vpack.c.b16 %v1479, %v1475
        %v1640 = vpack.c.b16 %v1480, %v1476
        %v1641 = vpack.c.b16 %v1481, %v1477
        %v1642 = vpack.c.b16 %v1486, %v1482
        %v1643 = vpack.c.b16 %v1487, %v1483
        %v1644 = vpack.c.b16 %v1488, %v1484
        %v1645 = vpack.c.b16 %v1489, %v1485
        %v1646 = vpack.c.b16 %v1494, %v1490
        %v1647 = vpack.c.b16 %v1495, %v1491
        %v1648 = vpack.c.b16 %v1496, %v1492
        %v1649 = vpack.c.b16 %v1497, %v1493
        %v1650 = vpack.c.b16 %v1502, %v1498
        %v1651 = vpack.c.b16 %v1503, %v1499
        %v1652 = vpack.c.b16 %v1504, %v1500
        %v1653 = vpack.c.b16 %v1505, %v1501
        %v1654 = vpack.c.b16 %v1510, %v1506
        %v1655 = vpack.c.b16 %v1511, %v1507
        %v1656 = vpack.c.b16 %v1512, %v1508
        %v1657 = vpack.c.b16 %v1513, %v1509
        %v1658 = vpack.c.b16 %v1518, %v1514
        %v1659 = vpack.c.b16 %v1519, %v1515
        %v1660 = vpack.c.b16 %v1520, %v1516
        %v1661 = vpack.c.b16 %v1521, %v1517
        %v1662 = vpack.c.b16 %v1526, %v1522
        %v1663 = vpack.c.b16 %v1527, %v1523
        %v1664 = vpack.c.b16 %v1528, %v1524
        %v1665 = vpack.c.b16 %v1529, %v1525
        %v1666 = vpack.c.b16 %v1534, %v1530
        %v1667 = vpack.c.b16 %v1535, %v1531
        %v1668 = vpack.c.b16 %v1536, %v1532
        %v1669 = vpack.c.b16 %v1537, %v1533
        %v1670 = vpack.c.b16 %v1542, %v1538
        %v1671 = vpack.c.b16 %v1543, %v1539
        %v1672 = vpack.c.b16 %v1544, %v1540
        %v1673 = vpack.c.b16 %v1545, %v1541
        %1802 = vmatpush.bf16.msra.mxu0 %v1574
        %1803 = vmatpush.bf16.msra.mxu0 %v1570
        %1804 = vmatpush.bf16.msra.mxu0 %v1566
        %1805 = vmatpush.bf16.msra.mxu0 %v1562
        %1806 = vmatpush.bf16.msra.mxu0 %v1558
        %1807 = vmatpush.bf16.msra.mxu0 %v1554
        %1808 = vmatpush.bf16.msra.mxu0 %v1550
        %1809 = vmatpush.bf16.msra.mxu0 %v1546
        %1810 = vmatmul.bf16.gmra.mxu0 %v992
        %v1811 = vpop.f32.mrf.mxu0
        %v1812 = vadd.f32 %v1154, %v1811
        %v1813 = vpop.f32.mrf.mxu0
        %v1814 = vadd.f32 %v1154, %v1813
        %1815 = vmatmul.bf16.gmra.mxu0 %v996
        %v1816 = vpop.f32.mrf.mxu0
        %v1817 = vadd.f32 %v1154, %v1816
        %v1818 = vpop.f32.mrf.mxu0
        %v1819 = vadd.f32 %v1154, %v1818
        %1820 = vmatmul.bf16.gmra.mxu0 %v1000
        %v1821 = vpop.f32.mrf.mxu0
        %v1822 = vadd.f32 %v1154, %v1821
        %v1823 = vpop.f32.mrf.mxu0
        %v1824 = vadd.f32 %v1154, %v1823
        %1825 = vmatmul.bf16.gmra.mxu0 %v1004
        %v1826 = vpop.f32.mrf.mxu0
        %v1827 = vadd.f32 %v1154, %v1826
        %v1828 = vpop.f32.mrf.mxu0
        %v1829 = vadd.f32 %v1154, %v1828
        %1830 = vmatmul.bf16.gmra.mxu0 %v1008
        %v1831 = vpop.f32.mrf.mxu0
        %v1832 = vadd.f32 %v1154, %v1831
        %v1833 = vpop.f32.mrf.mxu0
        %v1834 = vadd.f32 %v1154, %v1833
        %1835 = vmatmul.bf16.gmra.mxu0 %v1012
        %v1836 = vpop.f32.mrf.mxu0
        %v1837 = vadd.f32 %v1154, %v1836
        %v1838 = vpop.f32.mrf.mxu0
        %v1839 = vadd.f32 %v1154, %v1838
        %1840 = vmatmul.bf16.gmra.mxu0 %v1016
        %v1841 = vpop.f32.mrf.mxu0
        %v1842 = vadd.f32 %v1154, %v1841
        %v1843 = vpop.f32.mrf.mxu0
        %v1844 = vadd.f32 %v1154, %v1843
        %1845 = vmatmul.bf16.gmra.mxu0 %v1020
        %v1846 = vpop.f32.mrf.mxu0
        %v1847 = vadd.f32 %v1154, %v1846
        %v1848 = vpop.f32.mrf.mxu0
        %v1849 = vadd.f32 %v1154, %v1848
        %1850 = vdwg.mxu0
        %1851 = vmatpush.bf16.msra.mxu0 %v1606
        %1852 = vmatpush.bf16.msra.mxu0 %v1602
        %1853 = vmatpush.bf16.msra.mxu0 %v1598
        %1854 = vmatpush.bf16.msra.mxu0 %v1594
        %1855 = vmatpush.bf16.msra.mxu0 %v1590
        %1856 = vmatpush.bf16.msra.mxu0 %v1586
        %1857 = vmatpush.bf16.msra.mxu0 %v1582
        %1858 = vmatpush.bf16.msra.mxu0 %v1578
        %1859 = vmatmul.bf16.gmra.mxu0 %v993
        %v1860 = vpop.f32.mrf.mxu0
        %v1861 = vadd.f32 %v1812, %v1860
        %v1862 = vpop.f32.mrf.mxu0
        %v1863 = vadd.f32 %v1814, %v1862
        %1864 = vmatmul.bf16.gmra.mxu0 %v997
        %v1865 = vpop.f32.mrf.mxu0
        %v1866 = vadd.f32 %v1817, %v1865
        %v1867 = vpop.f32.mrf.mxu0
        %v1868 = vadd.f32 %v1819, %v1867
        %1869 = vmatmul.bf16.gmra.mxu0 %v1001
        %v1870 = vpop.f32.mrf.mxu0
        %v1871 = vadd.f32 %v1822, %v1870
        %v1872 = vpop.f32.mrf.mxu0
        %v1873 = vadd.f32 %v1824, %v1872
        %1874 = vmatmul.bf16.gmra.mxu0 %v1005
        %v1875 = vpop.f32.mrf.mxu0
        %v1876 = vadd.f32 %v1827, %v1875
        %v1877 = vpop.f32.mrf.mxu0
        %v1878 = vadd.f32 %v1829, %v1877
        %1879 = vmatmul.bf16.gmra.mxu0 %v1009
        %v1880 = vpop.f32.mrf.mxu0
        %v1881 = vadd.f32 %v1832, %v1880
        %v1882 = vpop.f32.mrf.mxu0
        %v1883 = vadd.f32 %v1834, %v1882
        %1884 = vmatmul.bf16.gmra.mxu0 %v1013
        %v1885 = vpop.f32.mrf.mxu0
        %v1886 = vadd.f32 %v1837, %v1885
        %v1887 = vpop.f32.mrf.mxu0
        %v1888 = vadd.f32 %v1839, %v1887
        %1889 = vmatmul.bf16.gmra.mxu0 %v1017
        %v1890 = vpop.f32.mrf.mxu0
        %v1891 = vadd.f32 %v1842, %v1890
        %v1892 = vpop.f32.mrf.mxu0
        %v1893 = vadd.f32 %v1844, %v1892
        %1894 = vmatmul.bf16.gmra.mxu0 %v1021
        %v1895 = vpop.f32.mrf.mxu0
        %v1896 = vadd.f32 %v1847, %v1895
        %v1897 = vpop.f32.mrf.mxu0
        %v1898 = vadd.f32 %v1849, %v1897
        %1899 = vdwg.mxu0
        %1900 = vmatpush.bf16.msra.mxu0 %v1638
        %1901 = vmatpush.bf16.msra.mxu0 %v1634
        %1902 = vmatpush.bf16.msra.mxu0 %v1630
        %1903 = vmatpush.bf16.msra.mxu0 %v1626
        %1904 = vmatpush.bf16.msra.mxu0 %v1622
        %1905 = vmatpush.bf16.msra.mxu0 %v1618
        %1906 = vmatpush.bf16.msra.mxu0 %v1614
        %1907 = vmatpush.bf16.msra.mxu0 %v1610
        %1908 = vmatmul.bf16.gmra.mxu0 %v994
        %v1909 = vpop.f32.mrf.mxu0
        %v1910 = vadd.f32 %v1861, %v1909
        %v1911 = vpop.f32.mrf.mxu0
        %v1912 = vadd.f32 %v1863, %v1911
        %1913 = vmatmul.bf16.gmra.mxu0 %v998
        %v1914 = vpop.f32.mrf.mxu0
        %v1915 = vadd.f32 %v1866, %v1914
        %v1916 = vpop.f32.mrf.mxu0
        %v1917 = vadd.f32 %v1868, %v1916
        %1918 = vmatmul.bf16.gmra.mxu0 %v1002
        %v1919 = vpop.f32.mrf.mxu0
        %v1920 = vadd.f32 %v1871, %v1919
        %v1921 = vpop.f32.mrf.mxu0
        %v1922 = vadd.f32 %v1873, %v1921
        %1923 = vmatmul.bf16.gmra.mxu0 %v1006
        %v1924 = vpop.f32.mrf.mxu0
        %v1925 = vadd.f32 %v1876, %v1924
        %v1926 = vpop.f32.mrf.mxu0
        %v1927 = vadd.f32 %v1878, %v1926
        %1928 = vmatmul.bf16.gmra.mxu0 %v1010
        %v1929 = vpop.f32.mrf.mxu0
        %v1930 = vadd.f32 %v1881, %v1929
        %v1931 = vpop.f32.mrf.mxu0
        %v1932 = vadd.f32 %v1883, %v1931
        %1933 = vmatmul.bf16.gmra.mxu0 %v1014
        %v1934 = vpop.f32.mrf.mxu0
        %v1935 = vadd.f32 %v1886, %v1934
        %v1936 = vpop.f32.mrf.mxu0
        %v1937 = vadd.f32 %v1888, %v1936
        %1938 = vmatmul.bf16.gmra.mxu0 %v1018
        %v1939 = vpop.f32.mrf.mxu0
        %v1940 = vadd.f32 %v1891, %v1939
        %v1941 = vpop.f32.mrf.mxu0
        %v1942 = vadd.f32 %v1893, %v1941
        %1943 = vmatmul.bf16.gmra.mxu0 %v1022
        %v1944 = vpop.f32.mrf.mxu0
        %v1945 = vadd.f32 %v1896, %v1944
        %v1946 = vpop.f32.mrf.mxu0
        %v1947 = vadd.f32 %v1898, %v1946
        %1948 = vdwg.mxu0
        %1949 = vmatpush.bf16.msra.mxu0 %v1670
        %1950 = vmatpush.bf16.msra.mxu0 %v1666
        %1951 = vmatpush.bf16.msra.mxu0 %v1662
        %1952 = vmatpush.bf16.msra.mxu0 %v1658
        %1953 = vmatpush.bf16.msra.mxu0 %v1654
        %1954 = vmatpush.bf16.msra.mxu0 %v1650
        %1955 = vmatpush.bf16.msra.mxu0 %v1646
        %1956 = vmatpush.bf16.msra.mxu0 %v1642
        %1957 = vmatmul.bf16.gmra.mxu0 %v995
        %v1958 = vpop.f32.mrf.mxu0
        %v1959 = vadd.f32 %v1910, %v1958
        %v1960 = vpop.f32.mrf.mxu0
        %v1961 = vadd.f32 %v1912, %v1960
        %1962 = vmatmul.bf16.gmra.mxu0 %v999
        %v1963 = vpop.f32.mrf.mxu0
        %v1964 = vadd.f32 %v1915, %v1963
        %v1965 = vpop.f32.mrf.mxu0
        %v1966 = vadd.f32 %v1917, %v1965
        %1967 = vmatmul.bf16.gmra.mxu0 %v1003
        %v1968 = vpop.f32.mrf.mxu0
        %v1969 = vadd.f32 %v1920, %v1968
        %v1970 = vpop.f32.mrf.mxu0
        %v1971 = vadd.f32 %v1922, %v1970
        %1972 = vmatmul.bf16.gmra.mxu0 %v1007
        %v1973 = vpop.f32.mrf.mxu0
        %v1974 = vadd.f32 %v1925, %v1973
        %v1975 = vpop.f32.mrf.mxu0
        %v1976 = vadd.f32 %v1927, %v1975
        %1977 = vmatmul.bf16.gmra.mxu0 %v1011
        %v1978 = vpop.f32.mrf.mxu0
        %v1979 = vadd.f32 %v1930, %v1978
        %v1980 = vpop.f32.mrf.mxu0
        %v1981 = vadd.f32 %v1932, %v1980
        %1982 = vmatmul.bf16.gmra.mxu0 %v1015
        %v1983 = vpop.f32.mrf.mxu0
        %v1984 = vadd.f32 %v1935, %v1983
        %v1985 = vpop.f32.mrf.mxu0
        %v1986 = vadd.f32 %v1937, %v1985
        %1987 = vmatmul.bf16.gmra.mxu0 %v1019
        %v1988 = vpop.f32.mrf.mxu0
        %v1989 = vadd.f32 %v1940, %v1988
        %v1990 = vpop.f32.mrf.mxu0
        %v1991 = vadd.f32 %v1942, %v1990
        %1992 = vmatmul.bf16.gmra.mxu0 %v1023
        %v1993 = vpop.f32.mrf.mxu0
        %v1994 = vadd.f32 %v1945, %v1993
        %v1995 = vpop.f32.mrf.mxu0
        %v1996 = vadd.f32 %v1947, %v1995
        %1997 = vdwg.mxu0
        %1998 = vmatpush.bf16.msra.mxu0 %v1575
        %1999 = vmatpush.bf16.msra.mxu0 %v1571
        %2000 = vmatpush.bf16.msra.mxu0 %v1567
        %2001 = vmatpush.bf16.msra.mxu0 %v1563
        %2002 = vmatpush.bf16.msra.mxu0 %v1559
        %2003 = vmatpush.bf16.msra.mxu0 %v1555
        %2004 = vmatpush.bf16.msra.mxu0 %v1551
        %2005 = vmatpush.bf16.msra.mxu0 %v1547
        %2006 = vmatmul.bf16.gmra.mxu0 %v992
        %v2007 = vpop.f32.mrf.mxu0
        %v2008 = vadd.f32 %v1155, %v2007
        %v2009 = vpop.f32.mrf.mxu0
        %v2010 = vadd.f32 %v1155, %v2009
        %2011 = vmatmul.bf16.gmra.mxu0 %v996
        %v2012 = vpop.f32.mrf.mxu0
        %v2013 = vadd.f32 %v1155, %v2012
        %v2014 = vpop.f32.mrf.mxu0
        %v2015 = vadd.f32 %v1155, %v2014
        %2016 = vmatmul.bf16.gmra.mxu0 %v1000
        %v2017 = vpop.f32.mrf.mxu0
        %v2018 = vadd.f32 %v1155, %v2017
        %v2019 = vpop.f32.mrf.mxu0
        %v2020 = vadd.f32 %v1155, %v2019
        %2021 = vmatmul.bf16.gmra.mxu0 %v1004
        %v2022 = vpop.f32.mrf.mxu0
        %v2023 = vadd.f32 %v1155, %v2022
        %v2024 = vpop.f32.mrf.mxu0
        %v2025 = vadd.f32 %v1155, %v2024
        %2026 = vmatmul.bf16.gmra.mxu0 %v1008
        %v2027 = vpop.f32.mrf.mxu0
        %v2028 = vadd.f32 %v1155, %v2027
        %v2029 = vpop.f32.mrf.mxu0
        %v2030 = vadd.f32 %v1155, %v2029
        %2031 = vmatmul.bf16.gmra.mxu0 %v1012
        %v2032 = vpop.f32.mrf.mxu0
        %v2033 = vadd.f32 %v1155, %v2032
        %v2034 = vpop.f32.mrf.mxu0
        %v2035 = vadd.f32 %v1155, %v2034
        %2036 = vmatmul.bf16.gmra.mxu0 %v1016
        %v2037 = vpop.f32.mrf.mxu0
        %v2038 = vadd.f32 %v1155, %v2037
        %v2039 = vpop.f32.mrf.mxu0
        %v2040 = vadd.f32 %v1155, %v2039
        %2041 = vmatmul.bf16.gmra.mxu0 %v1020
        %v2042 = vpop.f32.mrf.mxu0
        %v2043 = vadd.f32 %v1155, %v2042
        %v2044 = vpop.f32.mrf.mxu0
        %v2045 = vadd.f32 %v1155, %v2044
        %2046 = vdwg.mxu0
        %2047 = vmatpush.bf16.msra.mxu0 %v1607
        %2048 = vmatpush.bf16.msra.mxu0 %v1603
        %2049 = vmatpush.bf16.msra.mxu0 %v1599
        %2050 = vmatpush.bf16.msra.mxu0 %v1595
        %2051 = vmatpush.bf16.msra.mxu0 %v1591
        %2052 = vmatpush.bf16.msra.mxu0 %v1587
        %2053 = vmatpush.bf16.msra.mxu0 %v1583
        %2054 = vmatpush.bf16.msra.mxu0 %v1579
        %2055 = vmatmul.bf16.gmra.mxu0 %v993
        %v2056 = vpop.f32.mrf.mxu0
        %v2057 = vadd.f32 %v2008, %v2056
        %v2058 = vpop.f32.mrf.mxu0
        %v2059 = vadd.f32 %v2010, %v2058
        %2060 = vmatmul.bf16.gmra.mxu0 %v997
        %v2061 = vpop.f32.mrf.mxu0
        %v2062 = vadd.f32 %v2013, %v2061
        %v2063 = vpop.f32.mrf.mxu0
        %v2064 = vadd.f32 %v2015, %v2063
        %2065 = vmatmul.bf16.gmra.mxu0 %v1001
        %v2066 = vpop.f32.mrf.mxu0
        %v2067 = vadd.f32 %v2018, %v2066
        %v2068 = vpop.f32.mrf.mxu0
        %v2069 = vadd.f32 %v2020, %v2068
        %2070 = vmatmul.bf16.gmra.mxu0 %v1005
        %v2071 = vpop.f32.mrf.mxu0
        %v2072 = vadd.f32 %v2023, %v2071
        %v2073 = vpop.f32.mrf.mxu0
        %v2074 = vadd.f32 %v2025, %v2073
        %2075 = vmatmul.bf16.gmra.mxu0 %v1009
        %v2076 = vpop.f32.mrf.mxu0
        %v2077 = vadd.f32 %v2028, %v2076
        %v2078 = vpop.f32.mrf.mxu0
        %v2079 = vadd.f32 %v2030, %v2078
        %2080 = vmatmul.bf16.gmra.mxu0 %v1013
        %v2081 = vpop.f32.mrf.mxu0
        %v2082 = vadd.f32 %v2033, %v2081
        %v2083 = vpop.f32.mrf.mxu0
        %v2084 = vadd.f32 %v2035, %v2083
        %2085 = vmatmul.bf16.gmra.mxu0 %v1017
        %v2086 = vpop.f32.mrf.mxu0
        %v2087 = vadd.f32 %v2038, %v2086
        %v2088 = vpop.f32.mrf.mxu0
        %v2089 = vadd.f32 %v2040, %v2088
        %2090 = vmatmul.bf16.gmra.mxu0 %v1021
        %v2091 = vpop.f32.mrf.mxu0
        %v2092 = vadd.f32 %v2043, %v2091
        %v2093 = vpop.f32.mrf.mxu0
        %v2094 = vadd.f32 %v2045, %v2093
        %2095 = vdwg.mxu0
        %2096 = vmatpush.bf16.msra.mxu0 %v1639
        %2097 = vmatpush.bf16.msra.mxu0 %v1635
        %2098 = vmatpush.bf16.msra.mxu0 %v1631
        %2099 = vmatpush.bf16.msra.mxu0 %v1627
        %2100 = vmatpush.bf16.msra.mxu0 %v1623
        %2101 = vmatpush.bf16.msra.mxu0 %v1619
        %2102 = vmatpush.bf16.msra.mxu0 %v1615
        %2103 = vmatpush.bf16.msra.mxu0 %v1611
        %2104 = vmatmul.bf16.gmra.mxu0 %v994
        %v2105 = vpop.f32.mrf.mxu0
        %v2106 = vadd.f32 %v2057, %v2105
        %v2107 = vpop.f32.mrf.mxu0
        %v2108 = vadd.f32 %v2059, %v2107
        %2109 = vmatmul.bf16.gmra.mxu0 %v998
        %v2110 = vpop.f32.mrf.mxu0
        %v2111 = vadd.f32 %v2062, %v2110
        %v2112 = vpop.f32.mrf.mxu0
        %v2113 = vadd.f32 %v2064, %v2112
        %2114 = vmatmul.bf16.gmra.mxu0 %v1002
        %v2115 = vpop.f32.mrf.mxu0
        %v2116 = vadd.f32 %v2067, %v2115
        %v2117 = vpop.f32.mrf.mxu0
        %v2118 = vadd.f32 %v2069, %v2117
        %2119 = vmatmul.bf16.gmra.mxu0 %v1006
        %v2120 = vpop.f32.mrf.mxu0
        %v2121 = vadd.f32 %v2072, %v2120
        %v2122 = vpop.f32.mrf.mxu0
        %v2123 = vadd.f32 %v2074, %v2122
        %2124 = vmatmul.bf16.gmra.mxu0 %v1010
        %v2125 = vpop.f32.mrf.mxu0
        %v2126 = vadd.f32 %v2077, %v2125
        %v2127 = vpop.f32.mrf.mxu0
        %v2128 = vadd.f32 %v2079, %v2127
        %2129 = vmatmul.bf16.gmra.mxu0 %v1014
        %v2130 = vpop.f32.mrf.mxu0
        %v2131 = vadd.f32 %v2082, %v2130
        %v2132 = vpop.f32.mrf.mxu0
        %v2133 = vadd.f32 %v2084, %v2132
        %2134 = vmatmul.bf16.gmra.mxu0 %v1018
        %v2135 = vpop.f32.mrf.mxu0
        %v2136 = vadd.f32 %v2087, %v2135
        %v2137 = vpop.f32.mrf.mxu0
        %v2138 = vadd.f32 %v2089, %v2137
        %2139 = vmatmul.bf16.gmra.mxu0 %v1022
        %v2140 = vpop.f32.mrf.mxu0
        %v2141 = vadd.f32 %v2092, %v2140
        %v2142 = vpop.f32.mrf.mxu0
        %v2143 = vadd.f32 %v2094, %v2142
        %2144 = vdwg.mxu0
        %2145 = vmatpush.bf16.msra.mxu0 %v1671
        %2146 = vmatpush.bf16.msra.mxu0 %v1667
        %2147 = vmatpush.bf16.msra.mxu0 %v1663
        %2148 = vmatpush.bf16.msra.mxu0 %v1659
        %2149 = vmatpush.bf16.msra.mxu0 %v1655
        %2150 = vmatpush.bf16.msra.mxu0 %v1651
        %2151 = vmatpush.bf16.msra.mxu0 %v1647
        %2152 = vmatpush.bf16.msra.mxu0 %v1643
        %2153 = vmatmul.bf16.gmra.mxu0 %v995
        %v2154 = vpop.f32.mrf.mxu0
        %v2155 = vadd.f32 %v2106, %v2154
        %v2156 = vpop.f32.mrf.mxu0
        %v2157 = vadd.f32 %v2108, %v2156
        %2158 = vmatmul.bf16.gmra.mxu0 %v999
        %v2159 = vpop.f32.mrf.mxu0
        %v2160 = vadd.f32 %v2111, %v2159
        %v2161 = vpop.f32.mrf.mxu0
        %v2162 = vadd.f32 %v2113, %v2161
        %2163 = vmatmul.bf16.gmra.mxu0 %v1003
        %v2164 = vpop.f32.mrf.mxu0
        %v2165 = vadd.f32 %v2116, %v2164
        %v2166 = vpop.f32.mrf.mxu0
        %v2167 = vadd.f32 %v2118, %v2166
        %2168 = vmatmul.bf16.gmra.mxu0 %v1007
        %v2169 = vpop.f32.mrf.mxu0
        %v2170 = vadd.f32 %v2121, %v2169
        %v2171 = vpop.f32.mrf.mxu0
        %v2172 = vadd.f32 %v2123, %v2171
        %2173 = vmatmul.bf16.gmra.mxu0 %v1011
        %v2174 = vpop.f32.mrf.mxu0
        %v2175 = vadd.f32 %v2126, %v2174
        %v2176 = vpop.f32.mrf.mxu0
        %v2177 = vadd.f32 %v2128, %v2176
        %2178 = vmatmul.bf16.gmra.mxu0 %v1015
        %v2179 = vpop.f32.mrf.mxu0
        %v2180 = vadd.f32 %v2131, %v2179
        %v2181 = vpop.f32.mrf.mxu0
        %v2182 = vadd.f32 %v2133, %v2181
        %2183 = vmatmul.bf16.gmra.mxu0 %v1019
        %v2184 = vpop.f32.mrf.mxu0
        %v2185 = vadd.f32 %v2136, %v2184
        %v2186 = vpop.f32.mrf.mxu0
        %v2187 = vadd.f32 %v2138, %v2186
        %2188 = vmatmul.bf16.gmra.mxu0 %v1023
        %v2189 = vpop.f32.mrf.mxu0
        %v2190 = vadd.f32 %v2141, %v2189
        %v2191 = vpop.f32.mrf.mxu0
        %v2192 = vadd.f32 %v2143, %v2191
        %2193 = vdwg.mxu0
        %2194 = vmatpush.bf16.msra.mxu0 %v1576
        %2195 = vmatpush.bf16.msra.mxu0 %v1572
        %2196 = vmatpush.bf16.msra.mxu0 %v1568
        %2197 = vmatpush.bf16.msra.mxu0 %v1564
        %2198 = vmatpush.bf16.msra.mxu0 %v1560
        %2199 = vmatpush.bf16.msra.mxu0 %v1556
        %2200 = vmatpush.bf16.msra.mxu0 %v1552
        %2201 = vmatpush.bf16.msra.mxu0 %v1548
        %2202 = vmatmul.bf16.gmra.mxu0 %v992
        %v2203 = vpop.f32.mrf.mxu0
        %v2204 = vadd.f32 %v1156, %v2203
        %v2205 = vpop.f32.mrf.mxu0
        %v2206 = vadd.f32 %v1156, %v2205
        %2207 = vmatmul.bf16.gmra.mxu0 %v996
        %v2208 = vpop.f32.mrf.mxu0
        %v2209 = vadd.f32 %v1156, %v2208
        %v2210 = vpop.f32.mrf.mxu0
        %v2211 = vadd.f32 %v1156, %v2210
        %2212 = vmatmul.bf16.gmra.mxu0 %v1000
        %v2213 = vpop.f32.mrf.mxu0
        %v2214 = vadd.f32 %v1156, %v2213
        %v2215 = vpop.f32.mrf.mxu0
        %v2216 = vadd.f32 %v1156, %v2215
        %2217 = vmatmul.bf16.gmra.mxu0 %v1004
        %v2218 = vpop.f32.mrf.mxu0
        %v2219 = vadd.f32 %v1156, %v2218
        %v2220 = vpop.f32.mrf.mxu0
        %v2221 = vadd.f32 %v1156, %v2220
        %2222 = vmatmul.bf16.gmra.mxu0 %v1008
        %v2223 = vpop.f32.mrf.mxu0
        %v2224 = vadd.f32 %v1156, %v2223
        %v2225 = vpop.f32.mrf.mxu0
        %v2226 = vadd.f32 %v1156, %v2225
        %2227 = vmatmul.bf16.gmra.mxu0 %v1012
        %v2228 = vpop.f32.mrf.mxu0
        %v2229 = vadd.f32 %v1156, %v2228
        %v2230 = vpop.f32.mrf.mxu0
        %v2231 = vadd.f32 %v1156, %v2230
        %2232 = vmatmul.bf16.gmra.mxu0 %v1016
        %v2233 = vpop.f32.mrf.mxu0
        %v2234 = vadd.f32 %v1156, %v2233
        %v2235 = vpop.f32.mrf.mxu0
        %v2236 = vadd.f32 %v1156, %v2235
        %2237 = vmatmul.bf16.gmra.mxu0 %v1020
        %v2238 = vpop.f32.mrf.mxu0
        %v2239 = vadd.f32 %v1156, %v2238
        %v2240 = vpop.f32.mrf.mxu0
        %v2241 = vadd.f32 %v1156, %v2240
        %2242 = vdwg.mxu0
        %2243 = vmatpush.bf16.msra.mxu0 %v1608
        %2244 = vmatpush.bf16.msra.mxu0 %v1604
        %2245 = vmatpush.bf16.msra.mxu0 %v1600
        %2246 = vmatpush.bf16.msra.mxu0 %v1596
        %2247 = vmatpush.bf16.msra.mxu0 %v1592
        %2248 = vmatpush.bf16.msra.mxu0 %v1588
        %2249 = vmatpush.bf16.msra.mxu0 %v1584
        %2250 = vmatpush.bf16.msra.mxu0 %v1580
        %2251 = vmatmul.bf16.gmra.mxu0 %v993
        %v2252 = vpop.f32.mrf.mxu0
        %v2253 = vadd.f32 %v2204, %v2252
        %v2254 = vpop.f32.mrf.mxu0
        %v2255 = vadd.f32 %v2206, %v2254
        %2256 = vmatmul.bf16.gmra.mxu0 %v997
        %v2257 = vpop.f32.mrf.mxu0
        %v2258 = vadd.f32 %v2209, %v2257
        %v2259 = vpop.f32.mrf.mxu0
        %v2260 = vadd.f32 %v2211, %v2259
        %2261 = vmatmul.bf16.gmra.mxu0 %v1001
        %v2262 = vpop.f32.mrf.mxu0
        %v2263 = vadd.f32 %v2214, %v2262
        %v2264 = vpop.f32.mrf.mxu0
        %v2265 = vadd.f32 %v2216, %v2264
        %2266 = vmatmul.bf16.gmra.mxu0 %v1005
        %v2267 = vpop.f32.mrf.mxu0
        %v2268 = vadd.f32 %v2219, %v2267
        %v2269 = vpop.f32.mrf.mxu0
        %v2270 = vadd.f32 %v2221, %v2269
        %2271 = vmatmul.bf16.gmra.mxu0 %v1009
        %v2272 = vpop.f32.mrf.mxu0
        %v2273 = vadd.f32 %v2224, %v2272
        %v2274 = vpop.f32.mrf.mxu0
        %v2275 = vadd.f32 %v2226, %v2274
        %2276 = vmatmul.bf16.gmra.mxu0 %v1013
        %v2277 = vpop.f32.mrf.mxu0
        %v2278 = vadd.f32 %v2229, %v2277
        %v2279 = vpop.f32.mrf.mxu0
        %v2280 = vadd.f32 %v2231, %v2279
        %2281 = vmatmul.bf16.gmra.mxu0 %v1017
        %v2282 = vpop.f32.mrf.mxu0
        %v2283 = vadd.f32 %v2234, %v2282
        %v2284 = vpop.f32.mrf.mxu0
        %v2285 = vadd.f32 %v2236, %v2284
        %2286 = vmatmul.bf16.gmra.mxu0 %v1021
        %v2287 = vpop.f32.mrf.mxu0
        %v2288 = vadd.f32 %v2239, %v2287
        %v2289 = vpop.f32.mrf.mxu0
        %v2290 = vadd.f32 %v2241, %v2289
        %2291 = vdwg.mxu0
        %2292 = vmatpush.bf16.msra.mxu0 %v1640
        %2293 = vmatpush.bf16.msra.mxu0 %v1636
        %2294 = vmatpush.bf16.msra.mxu0 %v1632
        %2295 = vmatpush.bf16.msra.mxu0 %v1628
        %2296 = vmatpush.bf16.msra.mxu0 %v1624
        %2297 = vmatpush.bf16.msra.mxu0 %v1620
        %2298 = vmatpush.bf16.msra.mxu0 %v1616
        %2299 = vmatpush.bf16.msra.mxu0 %v1612
        %2300 = vmatmul.bf16.gmra.mxu0 %v994
        %v2301 = vpop.f32.mrf.mxu0
        %v2302 = vadd.f32 %v2253, %v2301
        %v2303 = vpop.f32.mrf.mxu0
        %v2304 = vadd.f32 %v2255, %v2303
        %2305 = vmatmul.bf16.gmra.mxu0 %v998
        %v2306 = vpop.f32.mrf.mxu0
        %v2307 = vadd.f32 %v2258, %v2306
        %v2308 = vpop.f32.mrf.mxu0
        %v2309 = vadd.f32 %v2260, %v2308
        %2310 = vmatmul.bf16.gmra.mxu0 %v1002
        %v2311 = vpop.f32.mrf.mxu0
        %v2312 = vadd.f32 %v2263, %v2311
        %v2313 = vpop.f32.mrf.mxu0
        %v2314 = vadd.f32 %v2265, %v2313
        %2315 = vmatmul.bf16.gmra.mxu0 %v1006
        %v2316 = vpop.f32.mrf.mxu0
        %v2317 = vadd.f32 %v2268, %v2316
        %v2318 = vpop.f32.mrf.mxu0
        %v2319 = vadd.f32 %v2270, %v2318
        %2320 = vmatmul.bf16.gmra.mxu0 %v1010
        %v2321 = vpop.f32.mrf.mxu0
        %v2322 = vadd.f32 %v2273, %v2321
        %v2323 = vpop.f32.mrf.mxu0
        %v2324 = vadd.f32 %v2275, %v2323
        %2325 = vmatmul.bf16.gmra.mxu0 %v1014
        %v2326 = vpop.f32.mrf.mxu0
        %v2327 = vadd.f32 %v2278, %v2326
        %v2328 = vpop.f32.mrf.mxu0
        %v2329 = vadd.f32 %v2280, %v2328
        %2330 = vmatmul.bf16.gmra.mxu0 %v1018
        %v2331 = vpop.f32.mrf.mxu0
        %v2332 = vadd.f32 %v2283, %v2331
        %v2333 = vpop.f32.mrf.mxu0
        %v2334 = vadd.f32 %v2285, %v2333
        %2335 = vmatmul.bf16.gmra.mxu0 %v1022
        %v2336 = vpop.f32.mrf.mxu0
        %v2337 = vadd.f32 %v2288, %v2336
        %v2338 = vpop.f32.mrf.mxu0
        %v2339 = vadd.f32 %v2290, %v2338
        %2340 = vdwg.mxu0
        %2341 = vmatpush.bf16.msra.mxu0 %v1672
        %2342 = vmatpush.bf16.msra.mxu0 %v1668
        %2343 = vmatpush.bf16.msra.mxu0 %v1664
        %2344 = vmatpush.bf16.msra.mxu0 %v1660
        %2345 = vmatpush.bf16.msra.mxu0 %v1656
        %2346 = vmatpush.bf16.msra.mxu0 %v1652
        %2347 = vmatpush.bf16.msra.mxu0 %v1648
        %2348 = vmatpush.bf16.msra.mxu0 %v1644
        %2349 = vmatmul.bf16.gmra.mxu0 %v995
        %v2350 = vpop.f32.mrf.mxu0
        %v2351 = vadd.f32 %v2302, %v2350
        %v2352 = vpop.f32.mrf.mxu0
        %v2353 = vadd.f32 %v2304, %v2352
        %2354 = vmatmul.bf16.gmra.mxu0 %v999
        %v2355 = vpop.f32.mrf.mxu0
        %v2356 = vadd.f32 %v2307, %v2355
        %v2357 = vpop.f32.mrf.mxu0
        %v2358 = vadd.f32 %v2309, %v2357
        %2359 = vmatmul.bf16.gmra.mxu0 %v1003
        %v2360 = vpop.f32.mrf.mxu0
        %v2361 = vadd.f32 %v2312, %v2360
        %v2362 = vpop.f32.mrf.mxu0
        %v2363 = vadd.f32 %v2314, %v2362
        %2364 = vmatmul.bf16.gmra.mxu0 %v1007
        %v2365 = vpop.f32.mrf.mxu0
        %v2366 = vadd.f32 %v2317, %v2365
        %v2367 = vpop.f32.mrf.mxu0
        %v2368 = vadd.f32 %v2319, %v2367
        %2369 = vmatmul.bf16.gmra.mxu0 %v1011
        %v2370 = vpop.f32.mrf.mxu0
        %v2371 = vadd.f32 %v2322, %v2370
        %v2372 = vpop.f32.mrf.mxu0
        %v2373 = vadd.f32 %v2324, %v2372
        %2374 = vmatmul.bf16.gmra.mxu0 %v1015
        %v2375 = vpop.f32.mrf.mxu0
        %v2376 = vadd.f32 %v2327, %v2375
        %v2377 = vpop.f32.mrf.mxu0
        %v2378 = vadd.f32 %v2329, %v2377
        %2379 = vmatmul.bf16.gmra.mxu0 %v1019
        %v2380 = vpop.f32.mrf.mxu0
        %v2381 = vadd.f32 %v2332, %v2380
        %v2382 = vpop.f32.mrf.mxu0
        %v2383 = vadd.f32 %v2334, %v2382
        %2384 = vmatmul.bf16.gmra.mxu0 %v1023
        %v2385 = vpop.f32.mrf.mxu0
        %v2386 = vadd.f32 %v2337, %v2385
        %v2387 = vpop.f32.mrf.mxu0
        %v2388 = vadd.f32 %v2339, %v2387
        %2389 = vdwg.mxu0
        %2390 = vmatpush.bf16.msra.mxu0 %v1577
        %2391 = vmatpush.bf16.msra.mxu0 %v1573
        %2392 = vmatpush.bf16.msra.mxu0 %v1569
        %2393 = vmatpush.bf16.msra.mxu0 %v1565
        %2394 = vmatpush.bf16.msra.mxu0 %v1561
        %2395 = vmatpush.bf16.msra.mxu0 %v1557
        %2396 = vmatpush.bf16.msra.mxu0 %v1553
        %2397 = vmatpush.bf16.msra.mxu0 %v1549
        %2398 = vmatmul.bf16.gmra.mxu0 %v992
        %v2399 = vpop.f32.mrf.mxu0
        %v2400 = vadd.f32 %v1157, %v2399
        %v2401 = vpop.f32.mrf.mxu0
        %v2402 = vadd.f32 %v1157, %v2401
        %2403 = vmatmul.bf16.gmra.mxu0 %v996
        %v2404 = vpop.f32.mrf.mxu0
        %v2405 = vadd.f32 %v1157, %v2404
        %v2406 = vpop.f32.mrf.mxu0
        %v2407 = vadd.f32 %v1157, %v2406
        %2408 = vmatmul.bf16.gmra.mxu0 %v1000
        %v2409 = vpop.f32.mrf.mxu0
        %v2410 = vadd.f32 %v1157, %v2409
        %v2411 = vpop.f32.mrf.mxu0
        %v2412 = vadd.f32 %v1157, %v2411
        %2413 = vmatmul.bf16.gmra.mxu0 %v1004
        %v2414 = vpop.f32.mrf.mxu0
        %v2415 = vadd.f32 %v1157, %v2414
        %v2416 = vpop.f32.mrf.mxu0
        %v2417 = vadd.f32 %v1157, %v2416
        %2418 = vmatmul.bf16.gmra.mxu0 %v1008
        %v2419 = vpop.f32.mrf.mxu0
        %v2420 = vadd.f32 %v1157, %v2419
        %v2421 = vpop.f32.mrf.mxu0
        %v2422 = vadd.f32 %v1157, %v2421
        %2423 = vmatmul.bf16.gmra.mxu0 %v1012
        %v2424 = vpop.f32.mrf.mxu0
        %v2425 = vadd.f32 %v1157, %v2424
        %v2426 = vpop.f32.mrf.mxu0
        %v2427 = vadd.f32 %v1157, %v2426
        %2428 = vmatmul.bf16.gmra.mxu0 %v1016
        %v2429 = vpop.f32.mrf.mxu0
        %v2430 = vadd.f32 %v1157, %v2429
        %v2431 = vpop.f32.mrf.mxu0
        %v2432 = vadd.f32 %v1157, %v2431
        %2433 = vmatmul.bf16.gmra.mxu0 %v1020
        %v2434 = vpop.f32.mrf.mxu0
        %v2435 = vadd.f32 %v1157, %v2434
        %v2436 = vpop.f32.mrf.mxu0
        %v2437 = vadd.f32 %v1157, %v2436
        %2438 = vdwg.mxu0
        %2439 = vmatpush.bf16.msra.mxu0 %v1609
        %2440 = vmatpush.bf16.msra.mxu0 %v1605
        %2441 = vmatpush.bf16.msra.mxu0 %v1601
        %2442 = vmatpush.bf16.msra.mxu0 %v1597
        %2443 = vmatpush.bf16.msra.mxu0 %v1593
        %2444 = vmatpush.bf16.msra.mxu0 %v1589
        %2445 = vmatpush.bf16.msra.mxu0 %v1585
        %2446 = vmatpush.bf16.msra.mxu0 %v1581
        %2447 = vmatmul.bf16.gmra.mxu0 %v993
        %v2448 = vpop.f32.mrf.mxu0
        %v2449 = vadd.f32 %v2400, %v2448
        %v2450 = vpop.f32.mrf.mxu0
        %v2451 = vadd.f32 %v2402, %v2450
        %2452 = vmatmul.bf16.gmra.mxu0 %v997
        %v2453 = vpop.f32.mrf.mxu0
        %v2454 = vadd.f32 %v2405, %v2453
        %v2455 = vpop.f32.mrf.mxu0
        %v2456 = vadd.f32 %v2407, %v2455
        %2457 = vmatmul.bf16.gmra.mxu0 %v1001
        %v2458 = vpop.f32.mrf.mxu0
        %v2459 = vadd.f32 %v2410, %v2458
        %v2460 = vpop.f32.mrf.mxu0
        %v2461 = vadd.f32 %v2412, %v2460
        %2462 = vmatmul.bf16.gmra.mxu0 %v1005
        %v2463 = vpop.f32.mrf.mxu0
        %v2464 = vadd.f32 %v2415, %v2463
        %v2465 = vpop.f32.mrf.mxu0
        %v2466 = vadd.f32 %v2417, %v2465
        %2467 = vmatmul.bf16.gmra.mxu0 %v1009
        %v2468 = vpop.f32.mrf.mxu0
        %v2469 = vadd.f32 %v2420, %v2468
        %v2470 = vpop.f32.mrf.mxu0
        %v2471 = vadd.f32 %v2422, %v2470
        %2472 = vmatmul.bf16.gmra.mxu0 %v1013
        %v2473 = vpop.f32.mrf.mxu0
        %v2474 = vadd.f32 %v2425, %v2473
        %v2475 = vpop.f32.mrf.mxu0
        %v2476 = vadd.f32 %v2427, %v2475
        %2477 = vmatmul.bf16.gmra.mxu0 %v1017
        %v2478 = vpop.f32.mrf.mxu0
        %v2479 = vadd.f32 %v2430, %v2478
        %v2480 = vpop.f32.mrf.mxu0
        %v2481 = vadd.f32 %v2432, %v2480
        %2482 = vmatmul.bf16.gmra.mxu0 %v1021
        %v2483 = vpop.f32.mrf.mxu0
        %v2484 = vadd.f32 %v2435, %v2483
        %v2485 = vpop.f32.mrf.mxu0
        %v2486 = vadd.f32 %v2437, %v2485
        %2487 = vdwg.mxu0
        %2488 = vmatpush.bf16.msra.mxu0 %v1641
        %2489 = vmatpush.bf16.msra.mxu0 %v1637
        %2490 = vmatpush.bf16.msra.mxu0 %v1633
        %2491 = vmatpush.bf16.msra.mxu0 %v1629
        %2492 = vmatpush.bf16.msra.mxu0 %v1625
        %2493 = vmatpush.bf16.msra.mxu0 %v1621
        %2494 = vmatpush.bf16.msra.mxu0 %v1617
        %2495 = vmatpush.bf16.msra.mxu0 %v1613
        %2496 = vmatmul.bf16.gmra.mxu0 %v994
        %v2497 = vpop.f32.mrf.mxu0
        %v2498 = vadd.f32 %v2449, %v2497
        %v2499 = vpop.f32.mrf.mxu0
        %v2500 = vadd.f32 %v2451, %v2499
        %2501 = vmatmul.bf16.gmra.mxu0 %v998
        %v2502 = vpop.f32.mrf.mxu0
        %v2503 = vadd.f32 %v2454, %v2502
        %v2504 = vpop.f32.mrf.mxu0
        %v2505 = vadd.f32 %v2456, %v2504
        %2506 = vmatmul.bf16.gmra.mxu0 %v1002
        %v2507 = vpop.f32.mrf.mxu0
        %v2508 = vadd.f32 %v2459, %v2507
        %v2509 = vpop.f32.mrf.mxu0
        %v2510 = vadd.f32 %v2461, %v2509
        %2511 = vmatmul.bf16.gmra.mxu0 %v1006
        %v2512 = vpop.f32.mrf.mxu0
        %v2513 = vadd.f32 %v2464, %v2512
        %v2514 = vpop.f32.mrf.mxu0
        %v2515 = vadd.f32 %v2466, %v2514
        %2516 = vmatmul.bf16.gmra.mxu0 %v1010
        %v2517 = vpop.f32.mrf.mxu0
        %v2518 = vadd.f32 %v2469, %v2517
        %v2519 = vpop.f32.mrf.mxu0
        %v2520 = vadd.f32 %v2471, %v2519
        %2521 = vmatmul.bf16.gmra.mxu0 %v1014
        %v2522 = vpop.f32.mrf.mxu0
        %v2523 = vadd.f32 %v2474, %v2522
        %v2524 = vpop.f32.mrf.mxu0
        %v2525 = vadd.f32 %v2476, %v2524
        %2526 = vmatmul.bf16.gmra.mxu0 %v1018
        %v2527 = vpop.f32.mrf.mxu0
        %v2528 = vadd.f32 %v2479, %v2527
        %v2529 = vpop.f32.mrf.mxu0
        %v2530 = vadd.f32 %v2481, %v2529
        %2531 = vmatmul.bf16.gmra.mxu0 %v1022
        %v2532 = vpop.f32.mrf.mxu0
        %v2533 = vadd.f32 %v2484, %v2532
        %v2534 = vpop.f32.mrf.mxu0
        %v2535 = vadd.f32 %v2486, %v2534
        %2536 = vdwg.mxu0
        %2537 = vmatpush.bf16.msra.mxu0 %v1673
        %2538 = vmatpush.bf16.msra.mxu0 %v1669
        %2539 = vmatpush.bf16.msra.mxu0 %v1665
        %2540 = vmatpush.bf16.msra.mxu0 %v1661
        %2541 = vmatpush.bf16.msra.mxu0 %v1657
        %2542 = vmatpush.bf16.msra.mxu0 %v1653
        %2543 = vmatpush.bf16.msra.mxu0 %v1649
        %2544 = vmatpush.bf16.msra.mxu0 %v1645
        %2545 = vmatmul.bf16.gmra.mxu0 %v995
        %v2546 = vpop.f32.mrf.mxu0
        %v2547 = vadd.f32 %v2498, %v2546
        %v2548 = vpop.f32.mrf.mxu0
        %v2549 = vadd.f32 %v2500, %v2548
        %2550 = vmatmul.bf16.gmra.mxu0 %v999
        %v2551 = vpop.f32.mrf.mxu0
        %v2552 = vadd.f32 %v2503, %v2551
        %v2553 = vpop.f32.mrf.mxu0
        %v2554 = vadd.f32 %v2505, %v2553
        %2555 = vmatmul.bf16.gmra.mxu0 %v1003
        %v2556 = vpop.f32.mrf.mxu0
        %v2557 = vadd.f32 %v2508, %v2556
        %v2558 = vpop.f32.mrf.mxu0
        %v2559 = vadd.f32 %v2510, %v2558
        %2560 = vmatmul.bf16.gmra.mxu0 %v1007
        %v2561 = vpop.f32.mrf.mxu0
        %v2562 = vadd.f32 %v2513, %v2561
        %v2563 = vpop.f32.mrf.mxu0
        %v2564 = vadd.f32 %v2515, %v2563
        %2565 = vmatmul.bf16.gmra.mxu0 %v1011
        %v2566 = vpop.f32.mrf.mxu0
        %v2567 = vadd.f32 %v2518, %v2566
        %v2568 = vpop.f32.mrf.mxu0
        %v2569 = vadd.f32 %v2520, %v2568
        %2570 = vmatmul.bf16.gmra.mxu0 %v1015
        %v2571 = vpop.f32.mrf.mxu0
        %v2572 = vadd.f32 %v2523, %v2571
        %v2573 = vpop.f32.mrf.mxu0
        %v2574 = vadd.f32 %v2525, %v2573
        %2575 = vmatmul.bf16.gmra.mxu0 %v1019
        %v2576 = vpop.f32.mrf.mxu0
        %v2577 = vadd.f32 %v2528, %v2576
        %v2578 = vpop.f32.mrf.mxu0
        %v2579 = vadd.f32 %v2530, %v2578
        %2580 = vmatmul.bf16.gmra.mxu0 %v1023
        %v2581 = vpop.f32.mrf.mxu0
        %v2582 = vadd.f32 %v2533, %v2581
        %v2583 = vpop.f32.mrf.mxu0
        %v2584 = vadd.f32 %v2535, %v2583
        %2585 = vdwg.mxu0
        %vm2586 = vcmp.ge.f32.partialorder %v1959, 0.0
        %vm2587 = vcmp.ge.f32.partialorder %v2155, 0.0
        %vm2588 = vcmp.ge.f32.partialorder %v2351, 0.0
        %vm2589 = vcmp.ge.f32.partialorder %v2547, 0.0
        %vm2590 = vcmp.ge.f32.partialorder %v1961, 0.0
        %vm2591 = vcmp.ge.f32.partialorder %v2157, 0.0
        %vm2592 = vcmp.ge.f32.partialorder %v2353, 0.0
        %vm2593 = vcmp.ge.f32.partialorder %v2549, 0.0
        %vm2594 = vcmp.ge.f32.partialorder %v1964, 0.0
        %vm2595 = vcmp.ge.f32.partialorder %v2160, 0.0
        %vm2596 = vcmp.ge.f32.partialorder %v2356, 0.0
        %vm2597 = vcmp.ge.f32.partialorder %v2552, 0.0
        %vm2598 = vcmp.ge.f32.partialorder %v1966, 0.0
        %vm2599 = vcmp.ge.f32.partialorder %v2162, 0.0
        %vm2600 = vcmp.ge.f32.partialorder %v2358, 0.0
        %vm2601 = vcmp.ge.f32.partialorder %v2554, 0.0
        %vm2602 = vcmp.ge.f32.partialorder %v1969, 0.0
        %vm2603 = vcmp.ge.f32.partialorder %v2165, 0.0
        %vm2604 = vcmp.ge.f32.partialorder %v2361, 0.0
        %vm2605 = vcmp.ge.f32.partialorder %v2557, 0.0
        %vm2606 = vcmp.ge.f32.partialorder %v1971, 0.0
        %vm2607 = vcmp.ge.f32.partialorder %v2167, 0.0
        %vm2608 = vcmp.ge.f32.partialorder %v2363, 0.0
        %vm2609 = vcmp.ge.f32.partialorder %v2559, 0.0
        %vm2610 = vcmp.ge.f32.partialorder %v1974, 0.0
        %vm2611 = vcmp.ge.f32.partialorder %v2170, 0.0
        %vm2612 = vcmp.ge.f32.partialorder %v2366, 0.0
        %vm2613 = vcmp.ge.f32.partialorder %v2562, 0.0
        %vm2614 = vcmp.ge.f32.partialorder %v1976, 0.0
        %vm2615 = vcmp.ge.f32.partialorder %v2172, 0.0
        %vm2616 = vcmp.ge.f32.partialorder %v2368, 0.0
        %vm2617 = vcmp.ge.f32.partialorder %v2564, 0.0
        %vm2618 = vcmp.ge.f32.partialorder %v1979, 0.0
        %vm2619 = vcmp.ge.f32.partialorder %v2175, 0.0
        %vm2620 = vcmp.ge.f32.partialorder %v2371, 0.0
        %vm2621 = vcmp.ge.f32.partialorder %v2567, 0.0
        %vm2622 = vcmp.ge.f32.partialorder %v1981, 0.0
        %vm2623 = vcmp.ge.f32.partialorder %v2177, 0.0
        %vm2624 = vcmp.ge.f32.partialorder %v2373, 0.0
        %vm2625 = vcmp.ge.f32.partialorder %v2569, 0.0
        %vm2626 = vcmp.ge.f32.partialorder %v1984, 0.0
        %vm2627 = vcmp.ge.f32.partialorder %v2180, 0.0
        %vm2628 = vcmp.ge.f32.partialorder %v2376, 0.0
        %vm2629 = vcmp.ge.f32.partialorder %v2572, 0.0
        %vm2630 = vcmp.ge.f32.partialorder %v1986, 0.0
        %vm2631 = vcmp.ge.f32.partialorder %v2182, 0.0
        %vm2632 = vcmp.ge.f32.partialorder %v2378, 0.0
        %vm2633 = vcmp.ge.f32.partialorder %v2574, 0.0
        %vm2634 = vcmp.ge.f32.partialorder %v1989, 0.0
        %vm2635 = vcmp.ge.f32.partialorder %v2185, 0.0
        %vm2636 = vcmp.ge.f32.partialorder %v2381, 0.0
        %vm2637 = vcmp.ge.f32.partialorder %v2577, 0.0
        %vm2638 = vcmp.ge.f32.partialorder %v1991, 0.0
        %vm2639 = vcmp.ge.f32.partialorder %v2187, 0.0
        %vm2640 = vcmp.ge.f32.partialorder %v2383, 0.0
        %vm2641 = vcmp.ge.f32.partialorder %v2579, 0.0
        %vm2642 = vcmp.ge.f32.partialorder %v1994, 0.0
        %vm2643 = vcmp.ge.f32.partialorder %v2190, 0.0
        %vm2644 = vcmp.ge.f32.partialorder %v2386, 0.0
        %vm2645 = vcmp.ge.f32.partialorder %v2582, 0.0
        %vm2646 = vcmp.ge.f32.partialorder %v1996, 0.0
        %vm2647 = vcmp.ge.f32.partialorder %v2192, 0.0
        %vm2648 = vcmp.ge.f32.partialorder %v2388, 0.0
        %vm2649 = vcmp.ge.f32.partialorder %v2584, 0.0
        %v2650 = vmul.f32 %v1959, 0.2
        %v2651 = vmul.f32 %v2155, 0.2
        %v2652 = vmul.f32 %v2351, 0.2
        %v2653 = vmul.f32 %v2547, 0.2
        %v2654 = vmul.f32 %v1961, 0.2
        %v2655 = vmul.f32 %v2157, 0.2
        %v2656 = vmul.f32 %v2353, 0.2
        %v2657 = vmul.f32 %v2549, 0.2
        %v2658 = vmul.f32 %v1964, 0.2
        %v2659 = vmul.f32 %v2160, 0.2
        %v2660 = vmul.f32 %v2356, 0.2
        %v2661 = vmul.f32 %v2552, 0.2
        %v2662 = vmul.f32 %v1966, 0.2
        %v2663 = vmul.f32 %v2162, 0.2
        %v2664 = vmul.f32 %v2358, 0.2
        %v2665 = vmul.f32 %v2554, 0.2
        %v2666 = vmul.f32 %v1969, 0.2
        %v2667 = vmul.f32 %v2165, 0.2
        %v2668 = vmul.f32 %v2361, 0.2
        %v2669 = vmul.f32 %v2557, 0.2
        %v2670 = vmul.f32 %v1971, 0.2
        %v2671 = vmul.f32 %v2167, 0.2
        %v2672 = vmul.f32 %v2363, 0.2
        %v2673 = vmul.f32 %v2559, 0.2
        %v2674 = vmul.f32 %v1974, 0.2
        %v2675 = vmul.f32 %v2170, 0.2
        %v2676 = vmul.f32 %v2366, 0.2
        %v2677 = vmul.f32 %v2562, 0.2
        %v2678 = vmul.f32 %v1976, 0.2
        %v2679 = vmul.f32 %v2172, 0.2
        %v2680 = vmul.f32 %v2368, 0.2
        %v2681 = vmul.f32 %v2564, 0.2
        %v2682 = vmul.f32 %v1979, 0.2
        %v2683 = vmul.f32 %v2175, 0.2
        %v2684 = vmul.f32 %v2371, 0.2
        %v2685 = vmul.f32 %v2567, 0.2
        %v2686 = vmul.f32 %v1981, 0.2
        %v2687 = vmul.f32 %v2177, 0.2
        %v2688 = vmul.f32 %v2373, 0.2
        %v2689 = vmul.f32 %v2569, 0.2
        %v2690 = vmul.f32 %v1984, 0.2
        %v2691 = vmul.f32 %v2180, 0.2
        %v2692 = vmul.f32 %v2376, 0.2
        %v2693 = vmul.f32 %v2572, 0.2
        %v2694 = vmul.f32 %v1986, 0.2
        %v2695 = vmul.f32 %v2182, 0.2
        %v2696 = vmul.f32 %v2378, 0.2
        %v2697 = vmul.f32 %v2574, 0.2
        %v2698 = vmul.f32 %v1989, 0.2
        %v2699 = vmul.f32 %v2185, 0.2
        %v2700 = vmul.f32 %v2381, 0.2
        %v2701 = vmul.f32 %v2577, 0.2
        %v2702 = vmul.f32 %v1991, 0.2
        %v2703 = vmul.f32 %v2187, 0.2
        %v2704 = vmul.f32 %v2383, 0.2
        %v2705 = vmul.f32 %v2579, 0.2
        %v2706 = vmul.f32 %v1994, 0.2
        %v2707 = vmul.f32 %v2190, 0.2
        %v2708 = vmul.f32 %v2386, 0.2
        %v2709 = vmul.f32 %v2582, 0.2
        %v2710 = vmul.f32 %v1996, 0.2
        %v2711 = vmul.f32 %v2192, 0.2
        %v2712 = vmul.f32 %v2388, 0.2
        %v2713 = vmul.f32 %v2584, 0.2
        %v2714 = vsel %vm2586, %v1959, %v2650
        %v2715 = vsel %vm2587, %v2155, %v2651
        %v2716 = vsel %vm2588, %v2351, %v2652
        %v2717 = vsel %vm2589, %v2547, %v2653
        %v2718 = vsel %vm2590, %v1961, %v2654
        %v2719 = vsel %vm2591, %v2157, %v2655
        %v2720 = vsel %vm2592, %v2353, %v2656
        %v2721 = vsel %vm2593, %v2549, %v2657
        %v2722 = vsel %vm2594, %v1964, %v2658
        %v2723 = vsel %vm2595, %v2160, %v2659
        %v2724 = vsel %vm2596, %v2356, %v2660
        %v2725 = vsel %vm2597, %v2552, %v2661
        %v2726 = vsel %vm2598, %v1966, %v2662
        %v2727 = vsel %vm2599, %v2162, %v2663
        %v2728 = vsel %vm2600, %v2358, %v2664
        %v2729 = vsel %vm2601, %v2554, %v2665
        %v2730 = vsel %vm2602, %v1969, %v2666
        %v2731 = vsel %vm2603, %v2165, %v2667
        %v2732 = vsel %vm2604, %v2361, %v2668
        %v2733 = vsel %vm2605, %v2557, %v2669
        %v2734 = vsel %vm2606, %v1971, %v2670
        %v2735 = vsel %vm2607, %v2167, %v2671
        %v2736 = vsel %vm2608, %v2363, %v2672
        %v2737 = vsel %vm2609, %v2559, %v2673
        %v2738 = vsel %vm2610, %v1974, %v2674
        %v2739 = vsel %vm2611, %v2170, %v2675
        %v2740 = vsel %vm2612, %v2366, %v2676
        %v2741 = vsel %vm2613, %v2562, %v2677
        %v2742 = vsel %vm2614, %v1976, %v2678
        %v2743 = vsel %vm2615, %v2172, %v2679
        %v2744 = vsel %vm2616, %v2368, %v2680
        %v2745 = vsel %vm2617, %v2564, %v2681
        %v2746 = vsel %vm2618, %v1979, %v2682
        %v2747 = vsel %vm2619, %v2175, %v2683
        %v2748 = vsel %vm2620, %v2371, %v2684
        %v2749 = vsel %vm2621, %v2567, %v2685
        %v2750 = vsel %vm2622, %v1981, %v2686
        %v2751 = vsel %vm2623, %v2177, %v2687
        %v2752 = vsel %vm2624, %v2373, %v2688
        %v2753 = vsel %vm2625, %v2569, %v2689
        %v2754 = vsel %vm2626, %v1984, %v2690
        %v2755 = vsel %vm2627, %v2180, %v2691
        %v2756 = vsel %vm2628, %v2376, %v2692
        %v2757 = vsel %vm2629, %v2572, %v2693
        %v2758 = vsel %vm2630, %v1986, %v2694
        %v2759 = vsel %vm2631, %v2182, %v2695
        %v2760 = vsel %vm2632, %v2378, %v2696
        %v2761 = vsel %vm2633, %v2574, %v2697
        %v2762 = vsel %vm2634, %v1989, %v2698
        %v2763 = vsel %vm2635, %v2185, %v2699
        %v2764 = vsel %vm2636, %v2381, %v2700
        %v2765 = vsel %vm2637, %v2577, %v2701
        %v2766 = vsel %vm2638, %v1991, %v2702
        %v2767 = vsel %vm2639, %v2187, %v2703
        %v2768 = vsel %vm2640, %v2383, %v2704
        %v2769 = vsel %vm2641, %v2579, %v2705
        %v2770 = vsel %vm2642, %v1994, %v2706
        %v2771 = vsel %vm2643, %v2190, %v2707
        %v2772 = vsel %vm2644, %v2386, %v2708
        %v2773 = vsel %vm2645, %v2582, %v2709
        %v2774 = vsel %vm2646, %v1996, %v2710
        %v2775 = vsel %vm2647, %v2192, %v2711
        %v2776 = vsel %vm2648, %v2388, %v2712
        %v2777 = vsel %vm2649, %v2584, %v2713
        %v2778 = vld [vmem:[#allocation12] sm:$0xf]
        %v2779 = vpack.c.bf16 %v2718, %v2714
        %v2780 = vpack.c.bf16 %v2719, %v2715
        %v2781 = vpack.c.bf16 %v2720, %v2716
        %v2782 = vpack.c.bf16 %v2721, %v2717
        %v2783 = vpack.c.bf16 %v2726, %v2722
        %v2784 = vpack.c.bf16 %v2727, %v2723
        %v2785 = vpack.c.bf16 %v2728, %v2724
        %v2786 = vpack.c.bf16 %v2729, %v2725
        %v2787 = vpack.c.bf16 %v2734, %v2730
        %v2788 = vpack.c.bf16 %v2735, %v2731
        %v2789 = vpack.c.bf16 %v2736, %v2732
        %v2790 = vpack.c.bf16 %v2737, %v2733
        %v2791 = vpack.c.bf16 %v2742, %v2738
        %v2792 = vpack.c.bf16 %v2743, %v2739
        %v2793 = vpack.c.bf16 %v2744, %v2740
        %v2794 = vpack.c.bf16 %v2745, %v2741
        %v2795 = vpack.c.bf16 %v2750, %v2746
        %v2796 = vpack.c.bf16 %v2751, %v2747
        %v2797 = vpack.c.bf16 %v2752, %v2748
        %v2798 = vpack.c.bf16 %v2753, %v2749
        %v2799 = vpack.c.bf16 %v2758, %v2754
        %v2800 = vpack.c.bf16 %v2759, %v2755
        %v2801 = vpack.c.bf16 %v2760, %v2756
        %v2802 = vpack.c.bf16 %v2761, %v2757
        %v2803 = vpack.c.bf16 %v2766, %v2762
        %v2804 = vpack.c.bf16 %v2767, %v2763
        %v2805 = vpack.c.bf16 %v2768, %v2764
        %v2806 = vpack.c.bf16 %v2769, %v2765
        %v2807 = vpack.c.bf16 %v2774, %v2770
        %v2808 = vpack.c.bf16 %v2775, %v2771
        %v2809 = vpack.c.bf16 %v2776, %v2772
        %v2810 = vpack.c.bf16 %v2777, %v2773
        %v2811 = vld [vmem:[#allocation2] sm:$0x1]
        %2813 = vset.pattern.permute.xlu0 0
        %2814 = vperm.xlu0 %2813, %v2811
        %v2815 = vpop.permute.xlu0 %2814
        %v2817 = vperm.slane %v2815, 0
        %2819 = vst [vmem:[#allocation1] ss:$9 sm:$0xff] %v2778
        %v2820 = vld [vmem:[#allocation1] sm:$0xff]
        %v2821 = vld [vmem:[#allocation1 + $0x9] sm:$0xff]
        %v2822 = vld [vmem:[#allocation1 + $0x12] sm:$0xff]
        %v2823 = vld [vmem:[#allocation1 + $0x1b] sm:$0xff]
        %2828 = vmatpush.bf16.xpose.msra.mxu0 %v2807
        %2829 = vmatpush.bf16.xpose.msra.mxu0 %v2803
        %2830 = vmatpush.bf16.xpose.msra.mxu0 %v2799
        %2831 = vmatpush.bf16.xpose.msra.mxu0 %v2795
        %2832 = vmatpush.bf16.xpose.msra.mxu0 %v2791
        %2833 = vmatpush.bf16.xpose.msra.mxu0 %v2787
        %2834 = vmatpush.bf16.xpose.msra.mxu0 %v2783
        %2835 = vmatpush.bf16.xpose.msra.mxu0 %v2779
        %2836 = vmatmul.bf16.gmra.mxu0 %v2820
        %v2837 = vpop.f32.mrf.mxu0
        %v2838 = vadd.f32 %v2817, %v2837
        %v2839 = vpop.f32.mrf.mxu0
        %2840 = vdwg.mxu0
        %2841 = vmatpush.bf16.xpose.msra.mxu0 %v2808
        %2842 = vmatpush.bf16.xpose.msra.mxu0 %v2804
        %2843 = vmatpush.bf16.xpose.msra.mxu0 %v2800
        %2844 = vmatpush.bf16.xpose.msra.mxu0 %v2796
        %2845 = vmatpush.bf16.xpose.msra.mxu0 %v2792
        %2846 = vmatpush.bf16.xpose.msra.mxu0 %v2788
        %2847 = vmatpush.bf16.xpose.msra.mxu0 %v2784
        %2848 = vmatpush.bf16.xpose.msra.mxu0 %v2780
        %2849 = vmatmul.bf16.gmra.mxu0 %v2821
        %v2850 = vpop.f32.mrf.mxu0
        %v2851 = vadd.f32 %v2838, %v2850
        %v2852 = vpop.f32.mrf.mxu0
        %2853 = vdwg.mxu0
        %2854 = vmatpush.bf16.xpose.msra.mxu0 %v2809
        %2855 = vmatpush.bf16.xpose.msra.mxu0 %v2805
        %2856 = vmatpush.bf16.xpose.msra.mxu0 %v2801
        %2857 = vmatpush.bf16.xpose.msra.mxu0 %v2797
        %2858 = vmatpush.bf16.xpose.msra.mxu0 %v2793
        %2859 = vmatpush.bf16.xpose.msra.mxu0 %v2789
        %2860 = vmatpush.bf16.xpose.msra.mxu0 %v2785
        %2861 = vmatpush.bf16.xpose.msra.mxu0 %v2781
        %2862 = vmatmul.bf16.gmra.mxu0 %v2822
        %v2863 = vpop.f32.mrf.mxu0
        %v2864 = vadd.f32 %v2851, %v2863
        %v2865 = vpop.f32.mrf.mxu0
        %2866 = vdwg.mxu0
        %2867 = vmatpush.bf16.xpose.msra.mxu0 %v2810
        %2868 = vmatpush.bf16.xpose.msra.mxu0 %v2806
        %2869 = vmatpush.bf16.xpose.msra.mxu0 %v2802
        %2870 = vmatpush.bf16.xpose.msra.mxu0 %v2798
        %2871 = vmatpush.bf16.xpose.msra.mxu0 %v2794
        %2872 = vmatpush.bf16.xpose.msra.mxu0 %v2790
        %2873 = vmatpush.bf16.xpose.msra.mxu0 %v2786
        %2874 = vmatpush.bf16.xpose.msra.mxu0 %v2782
        %2875 = vmatmul.bf16.gmra.mxu0 %v2823
        %v2876 = vpop.f32.mrf.mxu0
        %v2877 = vadd.f32 %v2864, %v2876
        %v2878 = vpop.f32.mrf.mxu0
        %2879 = vdwg.mxu0
        %2880 = vst [vmem:[%s376] sm:$0x1] %v2877
        %s2881 = sand.u32 %s189, 1
        %s2882 = scalar_lea.sflag [#allocation5], %s2881
        %s2883 = sand.u32 %s189, 1
        %s2884 = scalar_lea.vmem [#allocation14], %s2883
        // Predicated region
        $region73: #{wasserstein_discriminator.1} parent=47 // pred_check
          %p2885 = pneg %p199
        $region74: #{wasserstein_discriminator.1} parent=47 // pred_check_branch
          %2887 = sbr.rel (%p2885) target = $region76
        $region75: #{wasserstein_discriminator.1} parent=47 // pred_region
          %2889 = vsyncadd %s2882, 0
          %s2890 = scalar_lea.hbm %s7, %s29
          %s2892 = sshll.u32 %s2884, 4
          %s2893 = int_to_ptr.vmem [resolvable:$true] %s2892
          %s2894 = sshll.u32 %s2890, 4
          %s2895 = int_to_ptr.hbm [resolvable:$true] %s2894
          %2897 = dma.vmem_to_hbm [thread:$0]  %s2893, 16, %s2895, %s2882
        $region76: #{wasserstein_discriminator.1} parent=47 // pred_fallthru
          _
      $region48: #{wasserstein_discriminator.1} parent=5 // pred_fallthru
        _
      %p2898 = scmp.le.s32.totalorder 2, %s24
      // Predicated region
      $region77: #{wasserstein_discriminator.1} parent=5 // pred_check
        %p2899 = pneg %p2898
      $region78: #{wasserstein_discriminator.1} parent=5 // pred_check_branch
        %2901 = sbr.rel (%p2899) target = $region80
      $region79: #{wasserstein_discriminator.1} parent=5 // pred_region
        %s2902 = ssub.s32 %s24, 2
        // Predicated region
        $region81: #{wasserstein_discriminator.1} parent=79 // pred_check
          %p2903 = pneg %p205
        $region82: #{wasserstein_discriminator.1} parent=79 // pred_check_branch
          %2905 = sbr.rel (%p2903) target = $region84
        $region83: #{wasserstein_discriminator.1} parent=79 // pred_region
          %s2906 = sand.u32 %s190, 1
          %s2907 = scalar_lea.sflag [#allocation5], %s2906
          %s2908 = sand.u32 %s190, 1
          %s2909 = scalar_lea.vmem [#allocation14], %s2908
          %2911 = dma.done %s2907, 16
        $region84: #{wasserstein_discriminator.1} parent=79 // pred_fallthru
          _
      $region80: #{wasserstein_discriminator.1} parent=5 // pred_fallthru
        _
    $region6: #{wasserstein_discriminator.1} parent=1 // loop_footer
      %s28 = sadd.s32 1, %s24
    $region7: #{wasserstein_discriminator.1} parent=1 // loop_footer_branch
      %23 = sbr.rel target = $region3
    $region8: #{wasserstein_discriminator.1} parent=1 // loop_exit
      _
    %2912 = vsyncpa [#allocation4], 1
    %s2913 = scalar_lea.sflag [#allocation4], 1
    %2914 = vsyncpa %s2913, 1
    %2915 = vsyncpa [#allocation7], 1
    %2916 = vsyncpa [#allocation10], 1
    %2917 = vsyncpa [#allocation13], 1
    %2918 = vsyncpa [#allocation5], 1
    %s2919 = scalar_lea.sflag [#allocation5], 1
    %2920 = vsyncpa %s2919, 1

</llo_original>
